<compile_context>
chip_gen: v6e
topology: v6e:2x2x1
jax: 0.10.0
libtpu: 0.0.40
codegen_flags: <defaults>
</compile_context>

<pallas_src>
import jax
import jax.numpy as jnp
from jax.experimental import pallas as pl
from jax.experimental.pallas import tpu as pltpu

EPS = 1e-5                     # matches torch.nn.LayerNorm default eps
MXU_DTYPE = jnp.bfloat16       # MXU operand dtype (accumulate in f32)
ACT_DTYPE = jnp.bfloat16       # inter-kernel activation dtype
VMEM_LIMIT = 32 * 1024 * 1024  # explicit scoped-VMEM headroom (safe on v5e/v6e/v7x)


# ----------------------------- tiling helpers -----------------------------

def _pick_time_chunk(length, batch, hidden, state_n):
    """Time-chunk size: capped at 256 steps and by a ~2 MiB f32 staging budget,
    rounded to a multiple of 8 so chunk*batch is always sublane-aligned."""
    budget_rows = max(8, (2 << 20) // (4 * max(state_n, hidden)))
    chunk = min(length, 256, max(1, budget_rows // max(batch, 1)))
    if chunk >= length:
        return length
    return max(8, (chunk // 8) * 8)


# ----------------------------- Pallas kernels -----------------------------

def linear_ln_kernel(x_ref, w_ref, b_ref, g_ref, bb_ref, o_ref):
    # o = LayerNorm(x @ W + b)   (fused input projection + model LN)
    acc = jnp.dot(x_ref[...].astype(MXU_DTYPE), w_ref[...],
                  preferred_element_type=jnp.float32)
    h = acc + b_ref[...]
    mu = jnp.mean(h, axis=-1, keepdims=True)
    var = jnp.mean(jnp.square(h - mu), axis=-1, keepdims=True)
    hn = (h - mu) * jax.lax.rsqrt(var + EPS)
    o_ref[...] = (hn * g_ref[...] + bb_ref[...]).astype(o_ref.dtype)


def linear_kernel(x_ref, w_ref, b_ref, o_ref):
    # o = x @ W + b   (output projection; f32 accumulate)
    acc = jnp.dot(x_ref[...].astype(MXU_DTYPE), w_ref[...],
                  preferred_element_type=jnp.float32)
    o_ref[...] = (acc + b_ref[...]).astype(o_ref.dtype)


def make_s4_cell_kernel(batch, chunk, fuse_model_ln):
    """Fused LiquidS4Cell + residual + layer LayerNorm over one time chunk.

    Layout: all row-wise tensors are (chunk*batch, feat) with row = t*batch + b.
    When `fuse_model_ln`, the model-level residual + LayerNorm of the layer
    epilogue is fused in as well (used for the last cell of each layer).
    """
    n_rows = chunk * batch

    def kernel(*refs):
        if fuse_model_ln:
            (u_ref, bt_ref, ct_ref, a_ref, d1_ref, g1_ref, b1_ref,
             r_ref, g2_ref, b2_ref, o_ref, x_state, ub_ref) = refs
        else:
            (u_ref, bt_ref, ct_ref, a_ref, d1_ref, g1_ref, b1_ref,
             o_ref, x_state, ub_ref) = refs

        @pl.when(pl.program_id(0) == 0)
        def _():
            x_state[...] = jnp.zeros_like(x_state)

        # Input projection onto the state, one MXU call for the whole chunk:
        # (chunk*batch, H) @ (H, N) -> (chunk*batch, N), f32 accumulate.
        ub_ref[...] = jnp.dot(u_ref[...], bt_ref[...],
                              preferred_element_type=jnp.float32)

        # Fold the carried state from the previous chunk into time step 0:
        # v'_0 = v_0 + a * x_prev.
        a_row = a_ref[...]                                   # (1, N) f32
        head = ub_ref[pl.ds(0, batch), :]
        ub_ref[pl.ds(0, batch), :] = head + a_row * x_state[...]

        # Log-depth (Hillis-Steele) inclusive scan over time (a is constant):
        #   x_t = sum_{s<=t} a^(t-s) * v'_s
        # Each pass is a full-slab FMA with a row shift of d*batch.
        state_n = ub_ref.shape[-1]
        z = ub_ref[...]                                      # (n_rows, N) f32
        decay = a_row
        d = 1
        while d < chunk:
            shift = d * batch
            shifted = jnp.concatenate(
                [jnp.zeros((shift, state_n), jnp.float32),
                 z[:n_rows - shift, :]], axis=0)
            z = z + decay * shifted
            decay = decay * decay
            d *= 2

        # Carry the last time step's state to the next chunk.
        x_state[...] = z[n_rows - batch:, :]

        # Hoisted output projection: (chunk*batch, N) @ (N, H).
        y = jnp.dot(z.astype(MXU_DTYPE), ct_ref[...],
                    preferred_element_type=jnp.float32)

        # TODO(synk): nn.Dropout implemented as identity (eval mode).
        # Epilogue: residual folded into the skip (d1 = D + 1), layer LayerNorm.
        u = u_ref[...].astype(jnp.float32)   # re-read: bounds vreg live range
        h = y + d1_ref[...] * u
        mu = jnp.mean(h, axis=-1, keepdims=True)
        var = jnp.mean(jnp.square(h - mu), axis=-1, keepdims=True)
        h = (h - mu) * jax.lax.rsqrt(var + EPS) * g1_ref[...] + b1_ref[...]

        if fuse_model_ln:
            # Fused model-level residual + LayerNorm (layer epilogue).
            w = h + r_ref[...].astype(jnp.float32)
            mu2 = jnp.mean(w, axis=-1, keepdims=True)
            var2 = jnp.mean(jnp.square(w - mu2), axis=-1, keepdims=True)
            h = (w - mu2) * jax.lax.rsqrt(var2 + EPS) * g2_ref[...] + b2_ref[...]

        o_ref[...] = h.astype(o_ref.dtype)

    return kernel


# ----------------------------- kernel wrappers -----------------------------

def pallas_linear_ln(x2d, w_t, b2d, g2d, bb2d, *, tm):
    m, k = x2d.shape
    n = w_t.shape[1]
    vec = pl.BlockSpec((1, n), lambda i: (0, 0))
    return pl.pallas_call(
        linear_ln_kernel,
        out_shape=jax.ShapeDtypeStruct((m, n), ACT_DTYPE),
        grid=(m // tm,),
        in_specs=[pl.BlockSpec((tm, k), lambda i: (i, 0)),
                  pl.BlockSpec((k, n), lambda i: (0, 0)),
                  vec, vec, vec],
        out_specs=pl.BlockSpec((tm, n), lambda i: (i, 0)),
        compiler_params=pltpu.CompilerParams(
            dimension_semantics=("parallel",),
            vmem_limit_bytes=VMEM_LIMIT),
    )(x2d, w_t, b2d, g2d, bb2d)


def pallas_linear(x2d, w_t, b2d, *, tm, out_dtype=jnp.float32):
    m, k = x2d.shape
    n = w_t.shape[1]
    return pl.pallas_call(
        linear_kernel,
        out_shape=jax.ShapeDtypeStruct((m, n), out_dtype),
        grid=(m // tm,),
        in_specs=[pl.BlockSpec((tm, k), lambda i: (i, 0)),
                  pl.BlockSpec((k, n), lambda i: (0, 0)),
                  pl.BlockSpec((1, n), lambda i: (0, 0))],
        out_specs=pl.BlockSpec((tm, n), lambda i: (i, 0)),
        compiler_params=pltpu.CompilerParams(
            dimension_semantics=("parallel",),
            vmem_limit_bytes=VMEM_LIMIT),
    )(x2d, w_t, b2d)


def pallas_s4_cell(u2d, cell, a_row, d1, ln1_g, ln1_b, *, batch, chunk,
                   resid2d=None, ln2_g=None, ln2_b=None):
    m, h = u2d.shape                 # m = Lp * batch  (rows are t*batch + b)
    n = a_row.shape[1]
    n_chunks = m // (chunk * batch)
    fuse = resid2d is not None

    kernel = make_s4_cell_kernel(batch, chunk, fuse)
    row_spec = pl.BlockSpec((chunk * batch, h), lambda t: (t, 0))
    vec_h = pl.BlockSpec((1, h), lambda t: (0, 0))
    vec_n = pl.BlockSpec((1, n), lambda t: (0, 0))

    in_specs = [
        row_spec,                                   # u (bf16)
        pl.BlockSpec((h, n), lambda t: (0, 0)),     # B^T (bf16)
        pl.BlockSpec((n, h), lambda t: (0, 0)),     # C^T (bf16)
        vec_n,                                      # a = exp(dt * (-exp(Lambda)))
        vec_h,                                      # D + 1 (residual folded in)
        vec_h, vec_h,                               # layer LN gamma/beta
    ]
    args = [u2d, cell["Bt"], cell["Ct"], a_row, d1, ln1_g, ln1_b]
    if fuse:
        in_specs += [row_spec, vec_h, vec_h]        # layer residual, model LN
        args += [resid2d, ln2_g, ln2_b]

    return pl.pallas_call(
        kernel,
        out_shape=jax.ShapeDtypeStruct((m, h), ACT_DTYPE),
        grid=(n_chunks,),
        in_specs=in_specs,
        out_specs=row_spec,
        scratch_shapes=[
            pltpu.VMEM((batch, n), jnp.float32),          # recurrent state
            pltpu.VMEM((chunk * batch, n), jnp.float32),  # u@B^T staging
        ],
        compiler_params=pltpu.CompilerParams(
            dimension_semantics=("arbitrary",),
            vmem_limit_bytes=VMEM_LIMIT),
    )(*args)


# ----------------------------- model forward -----------------------------

def liquid_s4_forward(x_bli, params):
    """x: (B, L, input_size) -> (B, L, output_size)"""
    B, L, In = x_bli.shape
    H = params["norm_g"].shape[1]
    Out = params["Wo_t"].shape[1]
    N = params["layers"][0]["cells"][0]["Lambda"].shape[0]

    chunk = _pick_time_chunk(L, B, H, N)
    Lp = pl.cdiv(L, chunk) * chunk
    tm = chunk * B                      # row tile shared by all row kernels

    # one transpose to time-major; kernels keep (time*batch, feature) layout
    x_lbi = jnp.transpose(x_bli, (1, 0, 2))
    if Lp != L:
        x_lbi = jnp.pad(x_lbi, ((0, Lp - L), (0, 0), (0, 0)))
    x2d = x_lbi.reshape(Lp * B, In)

    # fused input projection + model LayerNorm (bf16 activations out)
    h = pallas_linear_ln(x2d, params["Wi_t"], params["bi"],
                         params["norm_g"], params["norm_b"], tm=tm)

    for layer in params["layers"]:
        residual = h
        hl = h
        n_cells = len(layer["cells"])
        for ci, cell in enumerate(layer["cells"]):
            # a = exp(dt * (-exp(Lambda)))  — tiny O(N) wrapper-side computation
            dt = jnp.exp(cell["log_dt"])
            a_row = jnp.exp(-dt * jnp.exp(cell["Lambda"])) \
                       .reshape(1, N).astype(jnp.float32)
            d1 = cell["D"] + 1.0          # fold per-cell residual into the skip
            # TODO(synk): nn.Dropout implemented as identity (eval mode).
            if ci == n_cells - 1:
                # last cell also fuses the layer-epilogue residual + model LN
                hl = pallas_s4_cell(hl, cell, a_row, d1,
                                    layer["ln_g"], layer["ln_b"],
                                    batch=B, chunk=chunk,
                                    resid2d=residual,
                                    ln2_g=params["norm_g"],
                                    ln2_b=params["norm_b"])
            else:
                hl = pallas_s4_cell(hl, cell, a_row, d1,
                                    layer["ln_g"], layer["ln_b"],
                                    batch=B, chunk=chunk)
        h = hl

    out = pallas_linear(h, params["Wo_t"], params["bo"], tm=tm)   # f32
    out = out.reshape(Lp, B, Out)[:L]
    return jnp.transpose(out, (1, 0, 2))


# ----------------------------- parameter init -----------------------------

def _xavier_uniform(key, shape):
    fan_a, fan_b = shape
    limit = (6.0 / (fan_a + fan_b)) ** 0.5
    return jax.random.uniform(key, shape, jnp.float32, -limit, limit)


def init_params(key, input_size, hidden_size, output_size,
                num_layers=3, n_cells=4, N=64):
    n_keys = 2 + num_layers * n_cells * 4
    keys = iter(jax.random.split(key, n_keys))

    params = {
        # weights stored pre-transposed to (in, out) and pre-cast to bf16 (MXU)
        "Wi_t": _xavier_uniform(next(keys), (input_size, hidden_size)).astype(MXU_DTYPE),
        "bi": jnp.zeros((1, hidden_size), jnp.float32),
        "Wo_t": _xavier_uniform(next(keys), (hidden_size, output_size)).astype(MXU_DTYPE),
        "bo": jnp.zeros((1, output_size), jnp.float32),
        "norm_g": jnp.ones((1, hidden_size), jnp.float32),
        "norm_b": jnp.zeros((1, hidden_size), jnp.float32),
        "layers": [],
    }
    for _ in range(num_layers):
        layer = {
            "ln_g": jnp.ones((1, hidden_size), jnp.float32),
            "ln_b": jnp.zeros((1, hidden_size), jnp.float32),
            "cells": [],
        }
        for _ in range(n_cells):
            cell = {
                "Lambda": 0.1 * jax.random.normal(next(keys), (N,), jnp.float32),
                "log_dt": jnp.zeros((1,), jnp.float32),
                # stored directly as B^T (H, N) / C^T (N, H), bf16 for the MXU
                "Bt": _xavier_uniform(next(keys), (hidden_size, N)).astype(MXU_DTYPE),
                "Ct": _xavier_uniform(next(keys), (N, hidden_size)).astype(MXU_DTYPE),
                "D": 0.1 * jax.random.normal(next(keys), (1, hidden_size), jnp.float32),
            }
            layer["cells"].append(cell)
        params["layers"].append(layer)
    return params


# ----------------------------- main -----------------------------

if __name__ == "__main__":
    key = jax.random.PRNGKey(0)
    kp, kx = jax.random.split(key)

    input_size, hidden_size, output_size = 16, 32, 8
    batch, seq = 2, 8
    num_layers = 3

    params = init_params(kp, input_size, hidden_size, output_size,
                         num_layers=num_layers)
    x = jax.random.normal(kx, (batch, seq, input_size), jnp.float32)

    fwd = jax.jit(liquid_s4_forward)
    out = jax.block_until_ready(fwd(x, params))

    assert out.shape == (batch, seq, output_size), out.shape
    assert bool(jnp.all(jnp.isfinite(out))), "non-finite output"
    print("KERNEL_OK")
</pallas_src>

<mosaic_0001>
module attributes {stable_mosaic.version = 11 : i64} {
  func.func @linear_ln_kernel(%arg0: i32, %arg1: memref<16x16xf32, #tpu.memory_space<vmem>>, %arg2: memref<16x32xbf16, #tpu.memory_space<vmem>>, %arg3: memref<1x32xf32, #tpu.memory_space<vmem>>, %arg4: memref<1x32xf32, #tpu.memory_space<vmem>>, %arg5: memref<1x32xf32, #tpu.memory_space<vmem>>, %arg6: memref<16x32xbf16, #tpu.memory_space<vmem>>) attributes {dimension_semantics = [#tpu.dimension_semantics<parallel>], iteration_bounds = array<i64: 1>, scalar_prefetch = 0 : i64, scratch_operands = 0 : i64, tpu.core_type = #tpu.core_type<tc>, window_params = [{transform_indices = @transform_0, window_bounds = array<i64: 16, 16>}, {pipeline_mode = #tpu.pipeline_mode<synchronous>, transform_indices = @transform_1, window_bounds = array<i64: 16, 32>}, {pipeline_mode = #tpu.pipeline_mode<synchronous>, transform_indices = @transform_2, window_bounds = array<i64: 1, 32>}, {pipeline_mode = #tpu.pipeline_mode<synchronous>, transform_indices = @transform_3, window_bounds = array<i64: 1, 32>}, {pipeline_mode = #tpu.pipeline_mode<synchronous>, transform_indices = @transform_4, window_bounds = array<i64: 1, 32>}, {transform_indices = @transform_5, window_bounds = array<i64: 16, 32>}]} {
    %c0 = arith.constant 0 : index
    %c0_0 = arith.constant 0 : index
    %0 = vector.load %arg1[%c0, %c0_0] : memref<16x16xf32, #tpu.memory_space<vmem>>, vector<16x16xf32>
    %1 = arith.truncf %0 : vector<16x16xf32> to vector<16x16xbf16>
    %c0_1 = arith.constant 0 : index
    %c0_2 = arith.constant 0 : index
    %2 = vector.load %arg2[%c0_1, %c0_2] : memref<16x32xbf16, #tpu.memory_space<vmem>>, vector<16x32xbf16>
    %cst = arith.constant dense<0.000000e+00> : vector<16x32xf32>
    %3 = tpu.matmul %1, %2, %cst {dimension_numbers = #tpu.dot_dimension_numbers<[1], [0], [0], [1], [0, 0, 1, 1], [], []>} : vector<16x16xbf16>, vector<16x32xbf16>, vector<16x32xf32> -> vector<16x32xf32>
    %c0_3 = arith.constant 0 : index
    %c0_4 = arith.constant 0 : index
    %4 = vector.load %arg3[%c0_3, %c0_4] : memref<1x32xf32, #tpu.memory_space<vmem>>, vector<1x32xf32>
    %5 = vector.broadcast %4 : vector<1x32xf32> to vector<16x32xf32>
    %6 = arith.addf %3, %5 : vector<16x32xf32>
    %cst_5 = arith.constant dense<0.000000e+00> : vector<16xf32>
    %7 = vector.multi_reduction <add>, %6, %cst_5 [1] : vector<16x32xf32> to vector<16xf32>
    %8 = vector.shape_cast %7 : vector<16xf32> to vector<16x1xf32>
    %cst_6 = arith.constant 3.200000e+01 : f32
    %9 = vector.broadcast %cst_6 : f32 to vector<16x1xf32>
    %10 = arith.divf %8, %9 : vector<16x1xf32>
    %11 = vector.broadcast %10 : vector<16x1xf32> to vector<16x32xf32>
    %12 = arith.subf %6, %11 : vector<16x32xf32>
    %13 = arith.mulf %12, %12 : vector<16x32xf32>
    %cst_7 = arith.constant dense<0.000000e+00> : vector<16xf32>
    %14 = vector.multi_reduction <add>, %13, %cst_7 [1] : vector<16x32xf32> to vector<16xf32>
    %15 = vector.shape_cast %14 : vector<16xf32> to vector<16x1xf32>
    %cst_8 = arith.constant 3.200000e+01 : f32
    %16 = vector.broadcast %cst_8 : f32 to vector<16x1xf32>
    %17 = arith.divf %15, %16 : vector<16x1xf32>
    %18 = vector.broadcast %10 : vector<16x1xf32> to vector<16x32xf32>
    %19 = arith.subf %6, %18 : vector<16x32xf32>
    %cst_9 = arith.constant 9.99999974E-6 : f32
    %20 = vector.broadcast %cst_9 : f32 to vector<16x1xf32>
    %21 = arith.addf %17, %20 : vector<16x1xf32>
    %22 = math.rsqrt %21 : vector<16x1xf32>
    %23 = vector.broadcast %22 : vector<16x1xf32> to vector<16x32xf32>
    %24 = arith.mulf %19, %23 : vector<16x32xf32>
    %c0_10 = arith.constant 0 : index
    %c0_11 = arith.constant 0 : index
    %25 = vector.load %arg4[%c0_10, %c0_11] : memref<1x32xf32, #tpu.memory_space<vmem>>, vector<1x32xf32>
    %26 = vector.broadcast %25 : vector<1x32xf32> to vector<16x32xf32>
    %27 = arith.mulf %24, %26 : vector<16x32xf32>
    %c0_12 = arith.constant 0 : index
    %c0_13 = arith.constant 0 : index
    %28 = vector.load %arg5[%c0_12, %c0_13] : memref<1x32xf32, #tpu.memory_space<vmem>>, vector<1x32xf32>
    %29 = vector.broadcast %28 : vector<1x32xf32> to vector<16x32xf32>
    %30 = arith.addf %27, %29 : vector<16x32xf32>
    %31 = arith.truncf %30 : vector<16x32xf32> to vector<16x32xbf16>
    %c0_14 = arith.constant 0 : index
    %c0_15 = arith.constant 0 : index
    %32 = vector.load %arg6[%c0_14, %c0_15] : memref<16x32xbf16, #tpu.memory_space<vmem>>, vector<16x32xbf16>
    tpu.vector_store %arg6[%c0_14, %c0_15], %31 {strides = array<i32>} : memref<16x32xbf16, #tpu.memory_space<vmem>>, vector<16x32xbf16>,
    return
  }
  func.func @transform_0(%arg0: i32) -> (i32, i32) {
    %c0_i32 = arith.constant 0 : i32
    %c0_i32_0 = arith.constant 0 : i32
    return %arg0, %c0_i32 : i32, i32
  }
  func.func @transform_1(%arg0: i32) -> (i32, i32) {
    %c0_i32 = arith.constant 0 : i32
    %c0_i32_0 = arith.constant 0 : i32
    %c0_i32_1 = arith.constant 0 : i32
    return %c0_i32, %c0_i32_0 : i32, i32
  }
  func.func @transform_2(%arg0: i32) -> (i32, i32) {
    %c0_i32 = arith.constant 0 : i32
    %c0_i32_0 = arith.constant 0 : i32
    %c0_i32_1 = arith.constant 0 : i32
    return %c0_i32, %c0_i32_0 : i32, i32
  }
  func.func @transform_3(%arg0: i32) -> (i32, i32) {
    %c0_i32 = arith.constant 0 : i32
    %c0_i32_0 = arith.constant 0 : i32
    %c0_i32_1 = arith.constant 0 : i32
    return %c0_i32, %c0_i32_0 : i32, i32
  }
  func.func @transform_4(%arg0: i32) -> (i32, i32) {
    %c0_i32 = arith.constant 0 : i32
    %c0_i32_0 = arith.constant 0 : i32
    %c0_i32_1 = arith.constant 0 : i32
    return %c0_i32, %c0_i32_0 : i32, i32
  }
  func.func @transform_5(%arg0: i32) -> (i32, i32) {
    %c0_i32 = arith.constant 0 : i32
    %c0_i32_0 = arith.constant 0 : i32
    return %arg0, %c0_i32 : i32, i32
  }
}

module attributes {stable_mosaic.version = 11 : i64} {
  func.func @kernel(%arg0: i32, %arg1: memref<16x32xbf16, #tpu.memory_space<vmem>>, %arg2: memref<32x64xbf16, #tpu.memory_space<vmem>>, %arg3: memref<64x32xbf16, #tpu.memory_space<vmem>>, %arg4: memref<1x64xf32, #tpu.memory_space<vmem>>, %arg5: memref<1x32xf32, #tpu.memory_space<vmem>>, %arg6: memref<1x32xf32, #tpu.memory_space<vmem>>, %arg7: memref<1x32xf32, #tpu.memory_space<vmem>>, %arg8: memref<16x32xbf16, #tpu.memory_space<vmem>>, %arg9: memref<1x32xf32, #tpu.memory_space<vmem>>, %arg10: memref<1x32xf32, #tpu.memory_space<vmem>>, %arg11: memref<16x32xbf16, #tpu.memory_space<vmem>>, %arg12: memref<2x64xf32, #tpu.memory_space<vmem>>, %arg13: memref<16x64xf32, #tpu.memory_space<vmem>>) attributes {dimension_semantics = [#tpu.dimension_semantics<arbitrary>], iteration_bounds = array<i64: 1>, scalar_prefetch = 0 : i64, scratch_operands = 2 : i64, tpu.core_type = #tpu.core_type<tc>, window_params = [{transform_indices = @transform_0, window_bounds = array<i64: 16, 32>}, {pipeline_mode = #tpu.pipeline_mode<synchronous>, transform_indices = @transform_1, window_bounds = array<i64: 32, 64>}, {pipeline_mode = #tpu.pipeline_mode<synchronous>, transform_indices = @transform_2, window_bounds = array<i64: 64, 32>}, {pipeline_mode = #tpu.pipeline_mode<synchronous>, transform_indices = @transform_3, window_bounds = array<i64: 1, 64>}, {pipeline_mode = #tpu.pipeline_mode<synchronous>, transform_indices = @transform_4, window_bounds = array<i64: 1, 32>}, {pipeline_mode = #tpu.pipeline_mode<synchronous>, transform_indices = @transform_5, window_bounds = array<i64: 1, 32>}, {pipeline_mode = #tpu.pipeline_mode<synchronous>, transform_indices = @transform_6, window_bounds = array<i64: 1, 32>}, {transform_indices = @transform_7, window_bounds = array<i64: 16, 32>}, {pipeline_mode = #tpu.pipeline_mode<synchronous>, transform_indices = @transform_8, window_bounds = array<i64: 1, 32>}, {pipeline_mode = #tpu.pipeline_mode<synchronous>, transform_indices = @transform_9, window_bounds = array<i64: 1, 32>}, {transform_indices = @transform_10, window_bounds = array<i64: 16, 32>}]} {
    %c0_i32 = arith.constant 0 : i32
    %0 = arith.cmpi eq, %arg0, %c0_i32 : i32
    %1 = arith.extui %0 : i1 to i32
    %c0_i32_0 = arith.constant 0 : i32
    %2 = arith.cmpi ne, %1, %c0_i32_0 : i32
    scf.if %2 {
      %cst_50 = arith.constant 0.000000e+00 : f32
      %99 = vector.broadcast %cst_50 : f32 to vector<2x64xf32>
      %c0_51 = arith.constant 0 : index
      %c0_52 = arith.constant 0 : index
      %100 = vector.load %arg12[%c0_51, %c0_52] : memref<2x64xf32, #tpu.memory_space<vmem>>, vector<2x64xf32>
      tpu.vector_store %arg12[%c0_51, %c0_52], %99 {strides = array<i32>} : memref<2x64xf32, #tpu.memory_space<vmem>>, vector<2x64xf32>,
    } else {
    }
    %c0 = arith.constant 0 : index
    %c0_1 = arith.constant 0 : index
    %3 = vector.load %arg1[%c0, %c0_1] : memref<16x32xbf16, #tpu.memory_space<vmem>>, vector<16x32xbf16>
    %c0_2 = arith.constant 0 : index
    %c0_3 = arith.constant 0 : index
    %4 = vector.load %arg2[%c0_2, %c0_3] : memref<32x64xbf16, #tpu.memory_space<vmem>>, vector<32x64xbf16>
    %cst = arith.constant dense<0.000000e+00> : vector<16x64xf32>
    %5 = tpu.matmul %3, %4, %cst {dimension_numbers = #tpu.dot_dimension_numbers<[1], [0], [0], [1], [0, 0, 1, 1], [], []>} : vector<16x32xbf16>, vector<32x64xbf16>, vector<16x64xf32> -> vector<16x64xf32>
    %c0_4 = arith.constant 0 : index
    %c0_5 = arith.constant 0 : index
    %6 = vector.load %arg13[%c0_4, %c0_5] : memref<16x64xf32, #tpu.memory_space<vmem>>, vector<16x64xf32>
    tpu.vector_store %arg13[%c0_4, %c0_5], %5 {strides = array<i32>} : memref<16x64xf32, #tpu.memory_space<vmem>>, vector<16x64xf32>,
    %c0_6 = arith.constant 0 : index
    %c0_7 = arith.constant 0 : index
    %7 = vector.load %arg4[%c0_6, %c0_7] : memref<1x64xf32, #tpu.memory_space<vmem>>, vector<1x64xf32>
    %c0_8 = arith.constant 0 : index
    %c0_9 = arith.constant 0 : index
    %8 = vector.load %arg13[%c0_8, %c0_9] : memref<16x64xf32, #tpu.memory_space<vmem>>, vector<2x64xf32>
    %c0_10 = arith.constant 0 : index
    %c0_11 = arith.constant 0 : index
    %9 = vector.load %arg12[%c0_10, %c0_11] : memref<2x64xf32, #tpu.memory_space<vmem>>, vector<2x64xf32>
    %10 = vector.broadcast %7 : vector<1x64xf32> to vector<2x64xf32>
    %11 = arith.mulf %10, %9 : vector<2x64xf32>
    %12 = arith.addf %8, %11 : vector<2x64xf32>
    %c0_12 = arith.constant 0 : index
    %c0_13 = arith.constant 0 : index
    %13 = vector.load %arg13[%c0_12, %c0_13] : memref<16x64xf32, #tpu.memory_space<vmem>>, vector<2x64xf32>
    tpu.vector_store %arg13[%c0_12, %c0_13], %12 {strides = array<i32>} : memref<16x64xf32, #tpu.memory_space<vmem>>, vector<2x64xf32>,
    %c0_14 = arith.constant 0 : index
    %c0_15 = arith.constant 0 : index
    %14 = vector.load %arg13[%c0_14, %c0_15] : memref<16x64xf32, #tpu.memory_space<vmem>>, vector<16x64xf32>
    %cst_16 = arith.constant 0.000000e+00 : f32
    %15 = vector.broadcast %cst_16 : f32 to vector<2x64xf32>
    %16 = vector.extract_strided_slice %14 {offsets = [0, 0], sizes = [14, 64], strides = [1, 1]} : vector<16x64xf32> to vector<14x64xf32>
    %17 = tpu.concatenate %15, %16 in 0 : vector<2x64xf32>, vector<14x64xf32> -> vector<16x64xf32>
    %18 = vector.broadcast %7 : vector<1x64xf32> to vector<16x64xf32>
    %19 = arith.mulf %18, %17 : vector<16x64xf32>
    %20 = arith.addf %14, %19 : vector<16x64xf32>
    %21 = arith.mulf %7, %7 : vector<1x64xf32>
    %cst_17 = arith.constant 0.000000e+00 : f32
    %22 = vector.broadcast %cst_17 : f32 to vector<4x64xf32>
    %23 = vector.extract_strided_slice %20 {offsets = [0, 0], sizes = [12, 64], strides = [1, 1]} : vector<16x64xf32> to vector<12x64xf32>
    %24 = tpu.concatenate %22, %23 in 0 : vector<4x64xf32>, vector<12x64xf32> -> vector<16x64xf32>
    %25 = vector.broadcast %21 : vector<1x64xf32> to vector<16x64xf32>
    %26 = arith.mulf %25, %24 : vector<16x64xf32>
    %27 = arith.addf %20, %26 : vector<16x64xf32>
    %28 = arith.mulf %21, %21 : vector<1x64xf32>
    %cst_18 = arith.constant 0.000000e+00 : f32
    %29 = vector.broadcast %cst_18 : f32 to vector<8x64xf32>
    %30 = vector.extract_strided_slice %27 {offsets = [0, 0], sizes = [8, 64], strides = [1, 1]} : vector<16x64xf32> to vector<8x64xf32>
    %31 = tpu.concatenate %29, %30 in 0 : vector<8x64xf32>, vector<8x64xf32> -> vector<16x64xf32>
    %32 = vector.broadcast %28 : vector<1x64xf32> to vector<16x64xf32>
    %33 = arith.mulf %32, %31 : vector<16x64xf32>
    %34 = arith.addf %27, %33 : vector<16x64xf32>
    %35 = vector.extract_strided_slice %34 {offsets = [14, 0], sizes = [2, 64], strides = [1, 1]} : vector<16x64xf32> to vector<2x64xf32>
    %c0_19 = arith.constant 0 : index
    %c0_20 = arith.constant 0 : index
    %36 = vector.load %arg12[%c0_19, %c0_20] : memref<2x64xf32, #tpu.memory_space<vmem>>, vector<2x64xf32>
    tpu.vector_store %arg12[%c0_19, %c0_20], %35 {strides = array<i32>} : memref<2x64xf32, #tpu.memory_space<vmem>>, vector<2x64xf32>,
    %37 = arith.truncf %34 : vector<16x64xf32> to vector<16x64xbf16>
    %c0_21 = arith.constant 0 : index
    %c0_22 = arith.constant 0 : index
    %38 = vector.load %arg3[%c0_21, %c0_22] : memref<64x32xbf16, #tpu.memory_space<vmem>>, vector<64x32xbf16>
    %cst_23 = arith.constant dense<0.000000e+00> : vector<16x32xf32>
    %39 = tpu.matmul %37, %38, %cst_23 {dimension_numbers = #tpu.dot_dimension_numbers<[1], [0], [0], [1], [0, 0, 1, 1], [], []>} : vector<16x64xbf16>, vector<64x32xbf16>, vector<16x32xf32> -> vector<16x32xf32>
    %c0_24 = arith.constant 0 : index
    %c0_25 = arith.constant 0 : index
    %40 = vector.load %arg1[%c0_24, %c0_25] : memref<16x32xbf16, #tpu.memory_space<vmem>>, vector<16x32xbf16>
    %41 = arith.extf %40 : vector<16x32xbf16> to vector<16x32xf32>
    %c0_26 = arith.constant 0 : index
    %c0_27 = arith.constant 0 : index
    %42 = vector.load %arg5[%c0_26, %c0_27] : memref<1x32xf32, #tpu.memory_space<vmem>>, vector<1x32xf32>
    %43 = vector.broadcast %42 : vector<1x32xf32> to vector<16x32xf32>
    %44 = arith.mulf %43, %41 : vector<16x32xf32>
    %45 = arith.addf %39, %44 : vector<16x32xf32>
    %cst_28 = arith.constant dense<0.000000e+00> : vector<16xf32>
    %46 = vector.multi_reduction <add>, %45, %cst_28 [1] : vector<16x32xf32> to vector<16xf32>
    %47 = vector.shape_cast %46 : vector<16xf32> to vector<16x1xf32>
    %cst_29 = arith.constant 3.200000e+01 : f32
    %48 = vector.broadcast %cst_29 : f32 to vector<16x1xf32>
    %49 = arith.divf %47, %48 : vector<16x1xf32>
    %50 = vector.broadcast %49 : vector<16x1xf32> to vector<16x32xf32>
    %51 = arith.subf %45, %50 : vector<16x32xf32>
    %52 = arith.mulf %51, %51 : vector<16x32xf32>
    %cst_30 = arith.constant dense<0.000000e+00> : vector<16xf32>
    %53 = vector.multi_reduction <add>, %52, %cst_30 [1] : vector<16x32xf32> to vector<16xf32>
    %54 = vector.shape_cast %53 : vector<16xf32> to vector<16x1xf32>
    %cst_31 = arith.constant 3.200000e+01 : f32
    %55 = vector.broadcast %cst_31 : f32 to vector<16x1xf32>
    %56 = arith.divf %54, %55 : vector<16x1xf32>
    %57 = vector.broadcast %49 : vector<16x1xf32> to vector<16x32xf32>
    %58 = arith.subf %45, %57 : vector<16x32xf32>
    %cst_32 = arith.constant 9.99999974E-6 : f32
    %59 = vector.broadcast %cst_32 : f32 to vector<16x1xf32>
    %60 = arith.addf %56, %59 : vector<16x1xf32>
    %61 = math.rsqrt %60 : vector<16x1xf32>
    %62 = vector.broadcast %61 : vector<16x1xf32> to vector<16x32xf32>
    %63 = arith.mulf %58, %62 : vector<16x32xf32>
    %c0_33 = arith.constant 0 : index
    %c0_34 = arith.constant 0 : index
    %64 = vector.load %arg6[%c0_33, %c0_34] : memref<1x32xf32, #tpu.memory_space<vmem>>, vector<1x32xf32>
    %65 = vector.broadcast %64 : vector<1x32xf32> to vector<16x32xf32>
    %66 = arith.mulf %63, %65 : vector<16x32xf32>
    %c0_35 = arith.constant 0 : index
    %c0_36 = arith.constant 0 : index
    %67 = vector.load %arg7[%c0_35, %c0_36] : memref<1x32xf32, #tpu.memory_space<vmem>>, vector<1x32xf32>
    %68 = vector.broadcast %67 : vector<1x32xf32> to vector<16x32xf32>
    %69 = arith.addf %66, %68 : vector<16x32xf32>
    %c0_37 = arith.constant 0 : index
    %c0_38 = arith.constant 0 : index
    %70 = vector.load %arg8[%c0_37, %c0_38] : memref<16x32xbf16, #tpu.memory_space<vmem>>, vector<16x32xbf16>
    %71 = arith.extf %70 : vector<16x32xbf16> to vector<16x32xf32>
    %72 = arith.addf %69, %71 : vector<16x32xf32>
    %cst_39 = arith.constant dense<0.000000e+00> : vector<16xf32>
    %73 = vector.multi_reduction <add>, %72, %cst_39 [1] : vector<16x32xf32> to vector<16xf32>
    %74 = vector.shape_cast %73 : vector<16xf32> to vector<16x1xf32>
    %cst_40 = arith.constant 3.200000e+01 : f32
    %75 = vector.broadcast %cst_40 : f32 to vector<16x1xf32>
    %76 = arith.divf %74, %75 : vector<16x1xf32>
    %77 = vector.broadcast %76 : vector<16x1xf32> to vector<16x32xf32>
    %78 = arith.subf %72, %77 : vector<16x32xf32>
    %79 = arith.mulf %78, %78 : vector<16x32xf32>
    %cst_41 = arith.constant dense<0.000000e+00> : vector<16xf32>
    %80 = vector.multi_reduction <add>, %79, %cst_41 [1] : vector<16x32xf32> to vector<16xf32>
    %81 = vector.shape_cast %80 : vector<16xf32> to vector<16x1xf32>
    %cst_42 = arith.constant 3.200000e+01 : f32
    %82 = vector.broadcast %cst_42 : f32 to vector<16x1xf32>
    %83 = arith.divf %81, %82 : vector<16x1xf32>
    %84 = vector.broadcast %76 : vector<16x1xf32> to vector<16x32xf32>
    %85 = arith.subf %72, %84 : vector<16x32xf32>
    %cst_43 = arith.constant 9.99999974E-6 : f32
    %86 = vector.broadcast %cst_43 : f32 to vector<16x1xf32>
    %87 = arith.addf %83, %86 : vector<16x1xf32>
    %88 = math.rsqrt %87 : vector<16x1xf32>
    %89 = vector.broadcast %88 : vector<16x1xf32> to vector<16x32xf32>
    %90 = arith.mulf %85, %89 : vector<16x32xf32>
    %c0_44 = arith.constant 0 : index
    %c0_45 = arith.constant 0 : index
    %91 = vector.load %arg9[%c0_44, %c0_45] : memref<1x32xf32, #tpu.memory_space<vmem>>, vector<1x32xf32>
    %92 = vector.broadcast %91 : vector<1x32xf32> to vector<16x32xf32>
    %93 = arith.mulf %90, %92 : vector<16x32xf32>
    %c0_46 = arith.constant 0 : index
    %c0_47 = arith.constant 0 : index
    %94 = vector.load %arg10[%c0_46, %c0_47] : memref<1x32xf32, #tpu.memory_space<vmem>>, vector<1x32xf32>
    %95 = vector.broadcast %94 : vector<1x32xf32> to vector<16x32xf32>
    %96 = arith.addf %93, %95 : vector<16x32xf32>
    %97 = arith.truncf %96 : vector<16x32xf32> to vector<16x32xbf16>
    %c0_48 = arith.constant 0 : index
    %c0_49 = arith.constant 0 : index
    %98 = vector.load %arg11[%c0_48, %c0_49] : memref<16x32xbf16, #tpu.memory_space<vmem>>, vector<16x32xbf16>
    tpu.vector_store %arg11[%c0_48, %c0_49], %97 {strides = array<i32>} : memref<16x32xbf16, #tpu.memory_space<vmem>>, vector<16x32xbf16>,
    return
  }
  func.func @transform_0(%arg0: i32) -> (i32, i32) {
    %c0_i32 = arith.constant 0 : i32
    %c0_i32_0 = arith.constant 0 : i32
    return %arg0, %c0_i32 : i32, i32
  }
  func.func @transform_1(%arg0: i32) -> (i32, i32) {
    %c0_i32 = arith.constant 0 : i32
    %c0_i32_0 = arith.constant 0 : i32
    %c0_i32_1 = arith.constant 0 : i32
    return %c0_i32, %c0_i32_0 : i32, i32
  }
  func.func @transform_2(%arg0: i32) -> (i32, i32) {
    %c0_i32 = arith.constant 0 : i32
    %c0_i32_0 = arith.constant 0 : i32
    %c0_i32_1 = arith.constant 0 : i32
    return %c0_i32, %c0_i32_0 : i32, i32
  }
  func.func @transform_3(%arg0: i32) -> (i32, i32) {
    %c0_i32 = arith.constant 0 : i32
    %c0_i32_0 = arith.constant 0 : i32
    %c0_i32_1 = arith.constant 0 : i32
    return %c0_i32, %c0_i32_0 : i32, i32
  }
  func.func @transform_4(%arg0: i32) -> (i32, i32) {
    %c0_i32 = arith.constant 0 : i32
    %c0_i32_0 = arith.constant 0 : i32
    %c0_i32_1 = arith.constant 0 : i32
    return %c0_i32, %c0_i32_0 : i32, i32
  }
  func.func @transform_5(%arg0: i32) -> (i32, i32) {
    %c0_i32 = arith.constant 0 : i32
    %c0_i32_0 = arith.constant 0 : i32
    %c0_i32_1 = arith.constant 0 : i32
    return %c0_i32, %c0_i32_0 : i32, i32
  }
  func.func @transform_6(%arg0: i32) -> (i32, i32) {
    %c0_i32 = arith.constant 0 : i32
    %c0_i32_0 = arith.constant 0 : i32
    %c0_i32_1 = arith.constant 0 : i32
    return %c0_i32, %c0_i32_0 : i32, i32
  }
  func.func @transform_7(%arg0: i32) -> (i32, i32) {
    %c0_i32 = arith.constant 0 : i32
    %c0_i32_0 = arith.constant 0 : i32
    return %arg0, %c0_i32 : i32, i32
  }
  func.func @transform_8(%arg0: i32) -> (i32, i32) {
    %c0_i32 = arith.constant 0 : i32
    %c0_i32_0 = arith.constant 0 : i32
    %c0_i32_1 = arith.constant 0 : i32
    return %c0_i32, %c0_i32_0 : i32, i32
  }
  func.func @transform_9(%arg0: i32) -> (i32, i32) {
    %c0_i32 = arith.constant 0 : i32
    %c0_i32_0 = arith.constant 0 : i32
    %c0_i32_1 = arith.constant 0 : i32
    return %c0_i32, %c0_i32_0 : i32, i32
  }
  func.func @transform_10(%arg0: i32) -> (i32, i32) {
    %c0_i32 = arith.constant 0 : i32
    %c0_i32_0 = arith.constant 0 : i32
    return %arg0, %c0_i32 : i32, i32
  }
}

module attributes {stable_mosaic.version = 11 : i64} {
  func.func @kernel(%arg0: i32, %arg1: memref<16x32xbf16, #tpu.memory_space<vmem>>, %arg2: memref<32x64xbf16, #tpu.memory_space<vmem>>, %arg3: memref<64x32xbf16, #tpu.memory_space<vmem>>, %arg4: memref<1x64xf32, #tpu.memory_space<vmem>>, %arg5: memref<1x32xf32, #tpu.memory_space<vmem>>, %arg6: memref<1x32xf32, #tpu.memory_space<vmem>>, %arg7: memref<1x32xf32, #tpu.memory_space<vmem>>, %arg8: memref<16x32xbf16, #tpu.memory_space<vmem>>, %arg9: memref<2x64xf32, #tpu.memory_space<vmem>>, %arg10: memref<16x64xf32, #tpu.memory_space<vmem>>) attributes {dimension_semantics = [#tpu.dimension_semantics<arbitrary>], iteration_bounds = array<i64: 1>, scalar_prefetch = 0 : i64, scratch_operands = 2 : i64, tpu.core_type = #tpu.core_type<tc>, window_params = [{transform_indices = @transform_0, window_bounds = array<i64: 16, 32>}, {pipeline_mode = #tpu.pipeline_mode<synchronous>, transform_indices = @transform_1, window_bounds = array<i64: 32, 64>}, {pipeline_mode = #tpu.pipeline_mode<synchronous>, transform_indices = @transform_2, window_bounds = array<i64: 64, 32>}, {pipeline_mode = #tpu.pipeline_mode<synchronous>, transform_indices = @transform_3, window_bounds = array<i64: 1, 64>}, {pipeline_mode = #tpu.pipeline_mode<synchronous>, transform_indices = @transform_4, window_bounds = array<i64: 1, 32>}, {pipeline_mode = #tpu.pipeline_mode<synchronous>, transform_indices = @transform_5, window_bounds = array<i64: 1, 32>}, {pipeline_mode = #tpu.pipeline_mode<synchronous>, transform_indices = @transform_6, window_bounds = array<i64: 1, 32>}, {transform_indices = @transform_7, window_bounds = array<i64: 16, 32>}]} {
    %c0_i32 = arith.constant 0 : i32
    %0 = arith.cmpi eq, %arg0, %c0_i32 : i32
    %1 = arith.extui %0 : i1 to i32
    %c0_i32_0 = arith.constant 0 : i32
    %2 = arith.cmpi ne, %1, %c0_i32_0 : i32
    scf.if %2 {
      %cst_39 = arith.constant 0.000000e+00 : f32
      %72 = vector.broadcast %cst_39 : f32 to vector<2x64xf32>
      %c0_40 = arith.constant 0 : index
      %c0_41 = arith.constant 0 : index
      %73 = vector.load %arg9[%c0_40, %c0_41] : memref<2x64xf32, #tpu.memory_space<vmem>>, vector<2x64xf32>
      tpu.vector_store %arg9[%c0_40, %c0_41], %72 {strides = array<i32>} : memref<2x64xf32, #tpu.memory_space<vmem>>, vector<2x64xf32>,
    } else {
    }
    %c0 = arith.constant 0 : index
    %c0_1 = arith.constant 0 : index
    %3 = vector.load %arg1[%c0, %c0_1] : memref<16x32xbf16, #tpu.memory_space<vmem>>, vector<16x32xbf16>
    %c0_2 = arith.constant 0 : index
    %c0_3 = arith.constant 0 : index
    %4 = vector.load %arg2[%c0_2, %c0_3] : memref<32x64xbf16, #tpu.memory_space<vmem>>, vector<32x64xbf16>
    %cst = arith.constant dense<0.000000e+00> : vector<16x64xf32>
    %5 = tpu.matmul %3, %4, %cst {dimension_numbers = #tpu.dot_dimension_numbers<[1], [0], [0], [1], [0, 0, 1, 1], [], []>} : vector<16x32xbf16>, vector<32x64xbf16>, vector<16x64xf32> -> vector<16x64xf32>
    %c0_4 = arith.constant 0 : index
    %c0_5 = arith.constant 0 : index
    %6 = vector.load %arg10[%c0_4, %c0_5] : memref<16x64xf32, #tpu.memory_space<vmem>>, vector<16x64xf32>
    tpu.vector_store %arg10[%c0_4, %c0_5], %5 {strides = array<i32>} : memref<16x64xf32, #tpu.memory_space<vmem>>, vector<16x64xf32>,
    %c0_6 = arith.constant 0 : index
    %c0_7 = arith.constant 0 : index
    %7 = vector.load %arg4[%c0_6, %c0_7] : memref<1x64xf32, #tpu.memory_space<vmem>>, vector<1x64xf32>
    %c0_8 = arith.constant 0 : index
    %c0_9 = arith.constant 0 : index
    %8 = vector.load %arg10[%c0_8, %c0_9] : memref<16x64xf32, #tpu.memory_space<vmem>>, vector<2x64xf32>
    %c0_10 = arith.constant 0 : index
    %c0_11 = arith.constant 0 : index
    %9 = vector.load %arg9[%c0_10, %c0_11] : memref<2x64xf32, #tpu.memory_space<vmem>>, vector<2x64xf32>
    %10 = vector.broadcast %7 : vector<1x64xf32> to vector<2x64xf32>
    %11 = arith.mulf %10, %9 : vector<2x64xf32>
    %12 = arith.addf %8, %11 : vector<2x64xf32>
    %c0_12 = arith.constant 0 : index
    %c0_13 = arith.constant 0 : index
    %13 = vector.load %arg10[%c0_12, %c0_13] : memref<16x64xf32, #tpu.memory_space<vmem>>, vector<2x64xf32>
    tpu.vector_store %arg10[%c0_12, %c0_13], %12 {strides = array<i32>} : memref<16x64xf32, #tpu.memory_space<vmem>>, vector<2x64xf32>,
    %c0_14 = arith.constant 0 : index
    %c0_15 = arith.constant 0 : index
    %14 = vector.load %arg10[%c0_14, %c0_15] : memref<16x64xf32, #tpu.memory_space<vmem>>, vector<16x64xf32>
    %cst_16 = arith.constant 0.000000e+00 : f32
    %15 = vector.broadcast %cst_16 : f32 to vector<2x64xf32>
    %16 = vector.extract_strided_slice %14 {offsets = [0, 0], sizes = [14, 64], strides = [1, 1]} : vector<16x64xf32> to vector<14x64xf32>
    %17 = tpu.concatenate %15, %16 in 0 : vector<2x64xf32>, vector<14x64xf32> -> vector<16x64xf32>
    %18 = vector.broadcast %7 : vector<1x64xf32> to vector<16x64xf32>
    %19 = arith.mulf %18, %17 : vector<16x64xf32>
    %20 = arith.addf %14, %19 : vector<16x64xf32>
    %21 = arith.mulf %7, %7 : vector<1x64xf32>
    %cst_17 = arith.constant 0.000000e+00 : f32
    %22 = vector.broadcast %cst_17 : f32 to vector<4x64xf32>
    %23 = vector.extract_strided_slice %20 {offsets = [0, 0], sizes = [12, 64], strides = [1, 1]} : vector<16x64xf32> to vector<12x64xf32>
    %24 = tpu.concatenate %22, %23 in 0 : vector<4x64xf32>, vector<12x64xf32> -> vector<16x64xf32>
    %25 = vector.broadcast %21 : vector<1x64xf32> to vector<16x64xf32>
    %26 = arith.mulf %25, %24 : vector<16x64xf32>
    %27 = arith.addf %20, %26 : vector<16x64xf32>
    %28 = arith.mulf %21, %21 : vector<1x64xf32>
    %cst_18 = arith.constant 0.000000e+00 : f32
    %29 = vector.broadcast %cst_18 : f32 to vector<8x64xf32>
    %30 = vector.extract_strided_slice %27 {offsets = [0, 0], sizes = [8, 64], strides = [1, 1]} : vector<16x64xf32> to vector<8x64xf32>
    %31 = tpu.concatenate %29, %30 in 0 : vector<8x64xf32>, vector<8x64xf32> -> vector<16x64xf32>
    %32 = vector.broadcast %28 : vector<1x64xf32> to vector<16x64xf32>
    %33 = arith.mulf %32, %31 : vector<16x64xf32>
    %34 = arith.addf %27, %33 : vector<16x64xf32>
    %35 = vector.extract_strided_slice %34 {offsets = [14, 0], sizes = [2, 64], strides = [1, 1]} : vector<16x64xf32> to vector<2x64xf32>
    %c0_19 = arith.constant 0 : index
    %c0_20 = arith.constant 0 : index
    %36 = vector.load %arg9[%c0_19, %c0_20] : memref<2x64xf32, #tpu.memory_space<vmem>>, vector<2x64xf32>
    tpu.vector_store %arg9[%c0_19, %c0_20], %35 {strides = array<i32>} : memref<2x64xf32, #tpu.memory_space<vmem>>, vector<2x64xf32>,
    %37 = arith.truncf %34 : vector<16x64xf32> to vector<16x64xbf16>
    %c0_21 = arith.constant 0 : index
    %c0_22 = arith.constant 0 : index
    %38 = vector.load %arg3[%c0_21, %c0_22] : memref<64x32xbf16, #tpu.memory_space<vmem>>, vector<64x32xbf16>
    %cst_23 = arith.constant dense<0.000000e+00> : vector<16x32xf32>
    %39 = tpu.matmul %37, %38, %cst_23 {dimension_numbers = #tpu.dot_dimension_numbers<[1], [0], [0], [1], [0, 0, 1, 1], [], []>} : vector<16x64xbf16>, vector<64x32xbf16>, vector<16x32xf32> -> vector<16x32xf32>
    %c0_24 = arith.constant 0 : index
    %c0_25 = arith.constant 0 : index
    %40 = vector.load %arg1[%c0_24, %c0_25] : memref<16x32xbf16, #tpu.memory_space<vmem>>, vector<16x32xbf16>
    %41 = arith.extf %40 : vector<16x32xbf16> to vector<16x32xf32>
    %c0_26 = arith.constant 0 : index
    %c0_27 = arith.constant 0 : index
    %42 = vector.load %arg5[%c0_26, %c0_27] : memref<1x32xf32, #tpu.memory_space<vmem>>, vector<1x32xf32>
    %43 = vector.broadcast %42 : vector<1x32xf32> to vector<16x32xf32>
    %44 = arith.mulf %43, %41 : vector<16x32xf32>
    %45 = arith.addf %39, %44 : vector<16x32xf32>
    %cst_28 = arith.constant dense<0.000000e+00> : vector<16xf32>
    %46 = vector.multi_reduction <add>, %45, %cst_28 [1] : vector<16x32xf32> to vector<16xf32>
    %47 = vector.shape_cast %46 : vector<16xf32> to vector<16x1xf32>
    %cst_29 = arith.constant 3.200000e+01 : f32
    %48 = vector.broadcast %cst_29 : f32 to vector<16x1xf32>
    %49 = arith.divf %47, %48 : vector<16x1xf32>
    %50 = vector.broadcast %49 : vector<16x1xf32> to vector<16x32xf32>
    %51 = arith.subf %45, %50 : vector<16x32xf32>
    %52 = arith.mulf %51, %51 : vector<16x32xf32>
    %cst_30 = arith.constant dense<0.000000e+00> : vector<16xf32>
    %53 = vector.multi_reduction <add>, %52, %cst_30 [1] : vector<16x32xf32> to vector<16xf32>
    %54 = vector.shape_cast %53 : vector<16xf32> to vector<16x1xf32>
    %cst_31 = arith.constant 3.200000e+01 : f32
    %55 = vector.broadcast %cst_31 : f32 to vector<16x1xf32>
    %56 = arith.divf %54, %55 : vector<16x1xf32>
    %57 = vector.broadcast %49 : vector<16x1xf32> to vector<16x32xf32>
    %58 = arith.subf %45, %57 : vector<16x32xf32>
    %cst_32 = arith.constant 9.99999974E-6 : f32
    %59 = vector.broadcast %cst_32 : f32 to vector<16x1xf32>
    %60 = arith.addf %56, %59 : vector<16x1xf32>
    %61 = math.rsqrt %60 : vector<16x1xf32>
    %62 = vector.broadcast %61 : vector<16x1xf32> to vector<16x32xf32>
    %63 = arith.mulf %58, %62 : vector<16x32xf32>
    %c0_33 = arith.constant 0 : index
    %c0_34 = arith.constant 0 : index
    %64 = vector.load %arg6[%c0_33, %c0_34] : memref<1x32xf32, #tpu.memory_space<vmem>>, vector<1x32xf32>
    %65 = vector.broadcast %64 : vector<1x32xf32> to vector<16x32xf32>
    %66 = arith.mulf %63, %65 : vector<16x32xf32>
    %c0_35 = arith.constant 0 : index
    %c0_36 = arith.constant 0 : index
    %67 = vector.load %arg7[%c0_35, %c0_36] : memref<1x32xf32, #tpu.memory_space<vmem>>, vector<1x32xf32>
    %68 = vector.broadcast %67 : vector<1x32xf32> to vector<16x32xf32>
    %69 = arith.addf %66, %68 : vector<16x32xf32>
    %70 = arith.truncf %69 : vector<16x32xf32> to vector<16x32xbf16>
    %c0_37 = arith.constant 0 : index
    %c0_38 = arith.constant 0 : index
    %71 = vector.load %arg8[%c0_37, %c0_38] : memref<16x32xbf16, #tpu.memory_space<vmem>>, vector<16x32xbf16>
    tpu.vector_store %arg8[%c0_37, %c0_38], %70 {strides = array<i32>} : memref<16x32xbf16, #tpu.memory_space<vmem>>, vector<16x32xbf16>,
    return
  }
  func.func @transform_0(%arg0: i32) -> (i32, i32) {
    %c0_i32 = arith.constant 0 : i32
    %c0_i32_0 = arith.constant 0 : i32
    return %arg0, %c0_i32 : i32, i32
  }
  func.func @transform_1(%arg0: i32) -> (i32, i32) {
    %c0_i32 = arith.constant 0 : i32
    %c0_i32_0 = arith.constant 0 : i32
    %c0_i32_1 = arith.constant 0 : i32
    return %c0_i32, %c0_i32_0 : i32, i32
  }
  func.func @transform_2(%arg0: i32) -> (i32, i32) {
    %c0_i32 = arith.constant 0 : i32
    %c0_i32_0 = arith.constant 0 : i32
    %c0_i32_1 = arith.constant 0 : i32
    return %c0_i32, %c0_i32_0 : i32, i32
  }
  func.func @transform_3(%arg0: i32) -> (i32, i32) {
    %c0_i32 = arith.constant 0 : i32
    %c0_i32_0 = arith.constant 0 : i32
    %c0_i32_1 = arith.constant 0 : i32
    return %c0_i32, %c0_i32_0 : i32, i32
  }
  func.func @transform_4(%arg0: i32) -> (i32, i32) {
    %c0_i32 = arith.constant 0 : i32
    %c0_i32_0 = arith.constant 0 : i32
    %c0_i32_1 = arith.constant 0 : i32
    return %c0_i32, %c0_i32_0 : i32, i32
  }
  func.func @transform_5(%arg0: i32) -> (i32, i32) {
    %c0_i32 = arith.constant 0 : i32
    %c0_i32_0 = arith.constant 0 : i32
    %c0_i32_1 = arith.constant 0 : i32
    return %c0_i32, %c0_i32_0 : i32, i32
  }
  func.func @transform_6(%arg0: i32) -> (i32, i32) {
    %c0_i32 = arith.constant 0 : i32
    %c0_i32_0 = arith.constant 0 : i32
    %c0_i32_1 = arith.constant 0 : i32
    return %c0_i32, %c0_i32_0 : i32, i32
  }
  func.func @transform_7(%arg0: i32) -> (i32, i32) {
    %c0_i32 = arith.constant 0 : i32
    %c0_i32_0 = arith.constant 0 : i32
    return %arg0, %c0_i32 : i32, i32
  }
}

module attributes {stable_mosaic.version = 11 : i64} {
  func.func @linear_kernel(%arg0: i32, %arg1: memref<16x32xbf16, #tpu.memory_space<vmem>>, %arg2: memref<32x8xbf16, #tpu.memory_space<vmem>>, %arg3: memref<1x8xf32, #tpu.memory_space<vmem>>, %arg4: memref<16x8xf32, #tpu.memory_space<vmem>>) attributes {dimension_semantics = [#tpu.dimension_semantics<parallel>], iteration_bounds = array<i64: 1>, scalar_prefetch = 0 : i64, scratch_operands = 0 : i64, tpu.core_type = #tpu.core_type<tc>, window_params = [{transform_indices = @transform_0, window_bounds = array<i64: 16, 32>}, {pipeline_mode = #tpu.pipeline_mode<synchronous>, transform_indices = @transform_1, window_bounds = array<i64: 32, 8>}, {pipeline_mode = #tpu.pipeline_mode<synchronous>, transform_indices = @transform_2, window_bounds = array<i64: 1, 8>}, {transform_indices = @transform_3, window_bounds = array<i64: 16, 8>}]} {
    %c0 = arith.constant 0 : index
    %c0_0 = arith.constant 0 : index
    %0 = vector.load %arg1[%c0, %c0_0] : memref<16x32xbf16, #tpu.memory_space<vmem>>, vector<16x32xbf16>
    %c0_1 = arith.constant 0 : index
    %c0_2 = arith.constant 0 : index
    %1 = vector.load %arg2[%c0_1, %c0_2] : memref<32x8xbf16, #tpu.memory_space<vmem>>, vector<32x8xbf16>
    %cst = arith.constant dense<0.000000e+00> : vector<16x8xf32>
    %2 = tpu.matmul %0, %1, %cst {dimension_numbers = #tpu.dot_dimension_numbers<[1], [0], [0], [1], [0, 0, 1, 1], [], []>} : vector<16x32xbf16>, vector<32x8xbf16>, vector<16x8xf32> -> vector<16x8xf32>
    %c0_3 = arith.constant 0 : index
    %c0_4 = arith.constant 0 : index
    %3 = vector.load %arg3[%c0_3, %c0_4] : memref<1x8xf32, #tpu.memory_space<vmem>>, vector<1x8xf32>
    %4 = vector.broadcast %3 : vector<1x8xf32> to vector<16x8xf32>
    %5 = arith.addf %2, %4 : vector<16x8xf32>
    %c0_5 = arith.constant 0 : index
    %c0_6 = arith.constant 0 : index
    %6 = vector.load %arg4[%c0_5, %c0_6] : memref<16x8xf32, #tpu.memory_space<vmem>>, vector<16x8xf32>
    tpu.vector_store %arg4[%c0_5, %c0_6], %5 {strides = array<i32>} : memref<16x8xf32, #tpu.memory_space<vmem>>, vector<16x8xf32>,
    return
  }
  func.func @transform_0(%arg0: i32) -> (i32, i32) {
    %c0_i32 = arith.constant 0 : i32
    %c0_i32_0 = arith.constant 0 : i32
    return %arg0, %c0_i32 : i32, i32
  }
  func.func @transform_1(%arg0: i32) -> (i32, i32) {
    %c0_i32 = arith.constant 0 : i32
    %c0_i32_0 = arith.constant 0 : i32
    %c0_i32_1 = arith.constant 0 : i32
    return %c0_i32, %c0_i32_0 : i32, i32
  }
  func.func @transform_2(%arg0: i32) -> (i32, i32) {
    %c0_i32 = arith.constant 0 : i32
    %c0_i32_0 = arith.constant 0 : i32
    %c0_i32_1 = arith.constant 0 : i32
    return %c0_i32, %c0_i32_0 : i32, i32
  }
  func.func @transform_3(%arg0: i32) -> (i32, i32) {
    %c0_i32 = arith.constant 0 : i32
    %c0_i32_0 = arith.constant 0 : i32
    return %arg0, %c0_i32 : i32, i32
  }
}

</mosaic_0001>

<llo_original>
// kernel: liquid_s4_forward.14
$region0: #{liquid_s4_forward.14}
  #allocation0 [shape = 'u32[]', space=smem, size = 0x4, offset = 0x4, fixed_abs, tag = 'smem constant byte address 0x4 - core index']
  #allocation1 [shape = 'u32[144,128]{1,0:T(1,128)}', space=vmem, size = 0x12000, scoped, tag = 'internal scratch']
  %s0 = inlined_call_operand.vmem [shape: f32[16,16], index: 0, kind: input, shape index: {}]
  %s1 = inlined_call_operand.vmem [shape: bf16[16,32], index: 1, kind: input, shape index: {}]
  %s2 = inlined_call_operand.vmem [shape: f32[1,32], index: 2, kind: input, shape index: {}]
  %s3 = inlined_call_operand.vmem [shape: f32[1,32], index: 3, kind: input, shape index: {}]
  %s4 = inlined_call_operand.vmem [shape: f32[1,32], index: 4, kind: input, shape index: {}]
  %s5 = inlined_call_operand.vmem [shape: bf16[16,32], index: 5, kind: output, shape index: {}]
  %s6 = sld [smem:[#allocation0]]
  $region30: #{liquid_s4_forward.14} parent=0
    _
  %s8 = ssub.s32 1, %s6
  %s9 = scalar_select 0, %s8, %s6
  // Predicated region
  $region2: #{liquid_s4_forward.14} parent=0 // pred_check
    _
  $region3: #{liquid_s4_forward.14} parent=0 // pred_check_branch
    %11 = sbr.rel (0) target = $region5
  $region4: #{liquid_s4_forward.14} parent=0 // pred_region
    _
  $region5: #{liquid_s4_forward.14} parent=0 // pred_fallthru
    _
  // Predicated region
  $region6: #{liquid_s4_forward.14} parent=0 // pred_check
    _
  $region7: #{liquid_s4_forward.14} parent=0 // pred_check_branch
    %13 = sbr.rel (0) target = $region9
  $region8: #{liquid_s4_forward.14} parent=0 // pred_region
    _
  $region9: #{liquid_s4_forward.14} parent=0 // pred_fallthru
    _
  // Predicated region
  $region10: #{liquid_s4_forward.14} parent=0 // pred_check
    _
  $region11: #{liquid_s4_forward.14} parent=0 // pred_check_branch
    %15 = sbr.rel (0) target = $region13
  $region12: #{liquid_s4_forward.14} parent=0 // pred_region
    _
  $region13: #{liquid_s4_forward.14} parent=0 // pred_fallthru
    _
  // Predicated region
  $region14: #{liquid_s4_forward.14} parent=0 // pred_check
    _
  $region15: #{liquid_s4_forward.14} parent=0 // pred_check_branch
    %17 = sbr.rel (0) target = $region17
  $region16: #{liquid_s4_forward.14} parent=0 // pred_region
    _
  $region17: #{liquid_s4_forward.14} parent=0 // pred_fallthru
    _
  // Predicated region
  $region18: #{liquid_s4_forward.14} parent=0 // pred_check
    _
  $region19: #{liquid_s4_forward.14} parent=0 // pred_check_branch
    %19 = sbr.rel (0) target = $region21
  $region20: #{liquid_s4_forward.14} parent=0 // pred_region
    _
  $region21: #{liquid_s4_forward.14} parent=0 // pred_fallthru
    _
  %v21 = vld [vmem:[%s0] sm:$0xff]
  %v22 = vld [vmem:[%s0 + $0x8] sm:$0xff]
  %v23 = vpack.c.bf16 %v22, %v21
  %v24 = vld [vmem:[%s1] sm:$0xf]
  %v25 = vld [vmem:[%s1 + $0x4] sm:$0xf]
  %v26 = vld [vmem:[%s2] sm:$0x1]
  %v28 = vlaneseq
  %v29 = vshrl.u32 %v28, 7
  %v30 = vsub.s32 0, %v29
  %v31 = vrot.slane %v26, %v30
  %v35 = vunpack.c.l.b16 %v24
  %v36 = vunpack.c.l.b16 %v25
  %v37 = vpack.c.b16 %v36, %v35
  %vm39 = vcmask 130048
  %v41 = vsel %vm39, %v23, 0
  %43 = vmatprep.subr.bf16.mxu0 0
  %44 = vmatpush1.bf16.msra.mxu0 0
  %45 = vmatprep.subr.bf16.mxu0 0
  %46 = vmatpush1.bf16.msra.mxu0 0
  %47 = vmatprep.subr.bf16.mxu0 0
  %48 = vmatpush1.bf16.msra.mxu0 0
  %49 = vmatprep.subr.bf16.mxu0 0
  %50 = vmatpush1.bf16.msra.mxu0 0
  %51 = vmatprep.subr.bf16.mxu0 0
  %52 = vmatpush1.bf16.msra.mxu0 0
  %53 = vmatprep.subr.bf16.mxu0 0
  %54 = vmatpush1.bf16.msra.mxu0 0
  %55 = vmatprep.subr.bf16.mxu0 0
  %56 = vmatpush1.bf16.msra.mxu0 0
  %57 = vmatprep.subr.bf16.mxu0 0
  %58 = vmatpush1.bf16.msra.mxu0 %v37
  %59 = vmatprep.subr.bf16.mxu0 0
  %60 = vmatpush2.bf16.msra.mxu0 0
  %61 = vmatprep.subr.bf16.mxu0 0
  %62 = vmatpush2.bf16.msra.mxu0 0
  %63 = vmatprep.subr.bf16.mxu0 0
  %64 = vmatpush2.bf16.msra.mxu0 0
  %65 = vmatprep.subr.bf16.mxu0 0
  %66 = vmatpush2.bf16.msra.mxu0 0
  %67 = vmatprep.subr.bf16.mxu0 0
  %68 = vmatpush2.bf16.msra.mxu0 0
  %69 = vmatprep.subr.bf16.mxu0 0
  %70 = vmatpush2.bf16.msra.mxu0 0
  %71 = vmatprep.subr.bf16.mxu0 0
  %72 = vmatpush2.bf16.msra.mxu0 0
  %73 = vmatprep.subr.bf16.mxu0 0
  %74 = vmatpush2.bf16.msra.mxu0 0
  %75 = vmatprep.mubr.bf16.mxu0 0
  %76 = vmatmul.mubr.bf16.gmra.mxu0 %v41
  %v77 = vpop.f32.mrf.mxu0
  %v78 = vadd.f32 %v31, %v77
  %v79 = vpop.f32.mrf.mxu0
  %v80 = vpop.f32.mrf.mxu0
  %v81 = vadd.f32 %v31, %v80
  %v82 = vpop.f32.mrf.mxu0
  %83 = vdwg.mxu0
  %vm84 = vcmask 261120
  %v85 = vsel %vm84, %v78, 0.0
  %86 = vadd.xlane.f32.xlu0 %v85
  %v87 = vpop.xlane.xlu0 %86
  %v88 = vsel %vm84, %v81, 0.0
  %89 = vadd.xlane.f32.xlu0 %v88
  %v90 = vpop.xlane.xlu0 %89
  %v91 = vrcp.pop 32.0
  %v92 = vmul.f32 %v87, %v91
  %v93 = vmul.f32 %v90, %v91
  %v94 = vsub.f32 %v78, %v92
  %v95 = vsub.f32 %v81, %v93
  %v96 = vmul.f32 %v94, %v94
  %v97 = vmul.f32 %v95, %v95
  %v98 = vsel %vm84, %v96, 0.0
  %99 = vadd.xlane.f32.xlu0 %v98
  %v100 = vpop.xlane.xlu0 %99
  %v101 = vsel %vm84, %v97, 0.0
  %102 = vadd.xlane.f32.xlu0 %v101
  %v103 = vpop.xlane.xlu0 %102
  %v104 = vmul.f32 %v100, %v91
  %v105 = vmul.f32 %v103, %v91
  %v106 = vadd.f32 %v104, 1e-05
  %v107 = vadd.f32 %v105, 1e-05
  %v108 = vrsqrt.pop %v106
  %v109 = vrsqrt.pop %v107
  %v110 = vmul.f32 %v94, %v108
  %v111 = vmul.f32 %v95, %v109
  %v112 = vld [vmem:[%s3] sm:$0x1]
  %v114 = vlaneseq
  %v115 = vshrl.u32 %v114, 7
  %v116 = vsub.s32 0, %v115
  %v117 = vrot.slane %v112, %v116
  %v119 = vmul.f32 %v110, %v117
  %v120 = vmul.f32 %v111, %v117
  %v121 = vld [vmem:[%s4] sm:$0x1]
  %v123 = vlaneseq
  %v124 = vshrl.u32 %v123, 7
  %v125 = vsub.s32 0, %v124
  %v126 = vrot.slane %v121, %v125
  %v128 = vadd.f32 %v119, %v126
  %v129 = vadd.f32 %v120, %v126
  %v130 = vpack.c.bf16 %v129, %v128
  %v132 = vunpack.c.l.b16 %v130
  %v133 = vunpack.c.h.b16 %v130
  %v134 = vpack.c.b16 %v132, %v132
  %v135 = vpack.c.b16 %v133, %v133
  %vm138 = vcmask 257024
  %139 = vst.msk [vmem:[%s5] sm:$0xf] %vm138, %v134
  %140 = vst.msk [vmem:[%s5 + $0x4] sm:$0xf] %vm138, %v135
  // Predicated region
  $region22: #{liquid_s4_forward.14} parent=0 // pred_check
    _
  $region23: #{liquid_s4_forward.14} parent=0 // pred_check_branch
    %142 = sbr.rel (0) target = $region25
  $region24: #{liquid_s4_forward.14} parent=0 // pred_region
    _
  $region25: #{liquid_s4_forward.14} parent=0 // pred_fallthru
    _
  // Predicated region
  $region26: #{liquid_s4_forward.14} parent=0 // pred_check
    _
  $region27: #{liquid_s4_forward.14} parent=0 // pred_check_branch
    %144 = sbr.rel (0) target = $region29
  $region28: #{liquid_s4_forward.14} parent=0 // pred_region
    _
  $region29: #{liquid_s4_forward.14} parent=0 // pred_fallthru
    _

// kernel: liquid_s4_forward.15
$region0: #{liquid_s4_forward.15}
  #allocation0 [shape = 'u32[]', space=smem, size = 0x4, offset = 0x4, fixed_abs, tag = 'smem constant byte address 0x4 - core index']
  #allocation1 [shape = 'u32[144,128]{1,0:T(1,128)}', space=vmem, size = 0x12000, scoped, tag = 'internal scratch']
  #allocation2 [shape = 'f32[2,64]{1,0:T(2,128)}', space=vmem, size = 0x400, scoped, tag = 'scratch operand']
  #allocation3 [shape = 'f32[16,64]{1,0:T(8,128)}', space=vmem, size = 0x2000, scoped, tag = 'scratch operand']
  %s0 = inlined_call_operand.vmem [shape: bf16[16,32], index: 0, kind: input, shape index: {}]
  %s1 = inlined_call_operand.vmem [shape: bf16[32,64], index: 1, kind: input, shape index: {}]
  %s2 = inlined_call_operand.vmem [shape: bf16[64,32], index: 2, kind: input, shape index: {}]
  %s3 = inlined_call_operand.vmem [shape: f32[1,64], index: 3, kind: input, shape index: {}]
  %s4 = inlined_call_operand.vmem [shape: f32[1,32], index: 4, kind: input, shape index: {}]
  %s5 = inlined_call_operand.vmem [shape: f32[1,32], index: 5, kind: input, shape index: {}]
  %s6 = inlined_call_operand.vmem [shape: f32[1,32], index: 6, kind: input, shape index: {}]
  %s7 = inlined_call_operand.vmem [shape: bf16[16,32], index: 7, kind: output, shape index: {}]
  %s8 = sld [smem:[#allocation0]]
  $region42: #{liquid_s4_forward.15} parent=0
    _
  %s10 = ssub.s32 1, %s8
  %s11 = scalar_select 0, %s10, %s8
  // Predicated region
  $region2: #{liquid_s4_forward.15} parent=0 // pred_check
    _
  $region3: #{liquid_s4_forward.15} parent=0 // pred_check_branch
    %13 = sbr.rel (0) target = $region5
  $region4: #{liquid_s4_forward.15} parent=0 // pred_region
    _
  $region5: #{liquid_s4_forward.15} parent=0 // pred_fallthru
    _
  // Predicated region
  $region6: #{liquid_s4_forward.15} parent=0 // pred_check
    _
  $region7: #{liquid_s4_forward.15} parent=0 // pred_check_branch
    %15 = sbr.rel (0) target = $region9
  $region8: #{liquid_s4_forward.15} parent=0 // pred_region
    _
  $region9: #{liquid_s4_forward.15} parent=0 // pred_fallthru
    _
  // Predicated region
  $region10: #{liquid_s4_forward.15} parent=0 // pred_check
    _
  $region11: #{liquid_s4_forward.15} parent=0 // pred_check_branch
    %17 = sbr.rel (0) target = $region13
  $region12: #{liquid_s4_forward.15} parent=0 // pred_region
    _
  $region13: #{liquid_s4_forward.15} parent=0 // pred_fallthru
    _
  // Predicated region
  $region14: #{liquid_s4_forward.15} parent=0 // pred_check
    _
  $region15: #{liquid_s4_forward.15} parent=0 // pred_check_branch
    %19 = sbr.rel (0) target = $region17
  $region16: #{liquid_s4_forward.15} parent=0 // pred_region
    _
  $region17: #{liquid_s4_forward.15} parent=0 // pred_fallthru
    _
  // Predicated region
  $region18: #{liquid_s4_forward.15} parent=0 // pred_check
    _
  $region19: #{liquid_s4_forward.15} parent=0 // pred_check_branch
    %21 = sbr.rel (0) target = $region21
  $region20: #{liquid_s4_forward.15} parent=0 // pred_region
    _
  $region21: #{liquid_s4_forward.15} parent=0 // pred_fallthru
    _
  // Predicated region
  $region22: #{liquid_s4_forward.15} parent=0 // pred_check
    _
  $region23: #{liquid_s4_forward.15} parent=0 // pred_check_branch
    %23 = sbr.rel (0) target = $region25
  $region24: #{liquid_s4_forward.15} parent=0 // pred_region
    _
  $region25: #{liquid_s4_forward.15} parent=0 // pred_fallthru
    _
  // Predicated region
  $region26: #{liquid_s4_forward.15} parent=0 // pred_check
    _
  $region27: #{liquid_s4_forward.15} parent=0 // pred_check_branch
    %25 = sbr.rel (0) target = $region29
  $region28: #{liquid_s4_forward.15} parent=0 // pred_region
    _
  $region29: #{liquid_s4_forward.15} parent=0 // pred_fallthru
    _
  %p27 = scmp.eq.s32.totalorder 0, 0
  // Predicated region
  $region30: #{liquid_s4_forward.15} parent=0 // pred_check
    %p28 = pneg %p27
  $region31: #{liquid_s4_forward.15} parent=0 // pred_check_branch
    %30 = sbr.rel (%p28) target = $region33
  $region32: #{liquid_s4_forward.15} parent=0 // pred_region
    %vm31 = vcmask 517120
    %32 = vst.msk [vmem:[#allocation2] sm:$0x3] %vm31, 0.0
  $region33: #{liquid_s4_forward.15} parent=0 // pred_fallthru
    _
  %v33 = vld [vmem:[%s0] sm:$0xf]
  %v34 = vld [vmem:[%s0 + $0x4] sm:$0xf]
  %v35 = vld [vmem:[%s1] sm:$0xf]
  %v36 = vld [vmem:[%s1 + $0x4] sm:$0xf]
  %v37 = vld [vmem:[%s1 + $0x8] sm:$0xf]
  %v38 = vld [vmem:[%s1 + $0xc] sm:$0xf]
  %v41 = vunpack.c.l.b16 %v33
  %v42 = vunpack.c.l.b16 %v34
  %v43 = vpack.c.b16 %v42, %v41
  %v48 = vunpack.c.l.b16 %v35
  %v49 = vunpack.c.l.b16 %v36
  %v50 = vunpack.c.l.b16 %v37
  %v51 = vunpack.c.l.b16 %v38
  %v52 = vpack.c.b16 %v49, %v48
  %v53 = vpack.c.b16 %v51, %v50
  %vm56 = vcmask 261120
  %v58 = vsel %vm56, %v43, 0
  %60 = vmatprep.subr.bf16.mxu0 0
  %61 = vmatpush1.bf16.msra.mxu0 0
  %62 = vmatprep.subr.bf16.mxu0 0
  %63 = vmatpush1.bf16.msra.mxu0 0
  %64 = vmatprep.subr.bf16.mxu0 0
  %65 = vmatpush1.bf16.msra.mxu0 0
  %66 = vmatprep.subr.bf16.mxu0 0
  %67 = vmatpush1.bf16.msra.mxu0 0
  %68 = vmatprep.subr.bf16.mxu0 0
  %69 = vmatpush1.bf16.msra.mxu0 0
  %70 = vmatprep.subr.bf16.mxu0 0
  %71 = vmatpush1.bf16.msra.mxu0 0
  %72 = vmatprep.subr.bf16.mxu0 0
  %73 = vmatpush1.bf16.msra.mxu0 %v53
  %74 = vmatprep.subr.bf16.mxu0 0
  %75 = vmatpush1.bf16.msra.mxu0 %v52
  %76 = vmatprep.subr.bf16.mxu0 0
  %77 = vmatpush2.bf16.msra.mxu0 0
  %78 = vmatprep.subr.bf16.mxu0 0
  %79 = vmatpush2.bf16.msra.mxu0 0
  %80 = vmatprep.subr.bf16.mxu0 0
  %81 = vmatpush2.bf16.msra.mxu0 0
  %82 = vmatprep.subr.bf16.mxu0 0
  %83 = vmatpush2.bf16.msra.mxu0 0
  %84 = vmatprep.subr.bf16.mxu0 0
  %85 = vmatpush2.bf16.msra.mxu0 0
  %86 = vmatprep.subr.bf16.mxu0 0
  %87 = vmatpush2.bf16.msra.mxu0 0
  %88 = vmatprep.subr.bf16.mxu0 0
  %89 = vmatpush2.bf16.msra.mxu0 0
  %90 = vmatprep.subr.bf16.mxu0 0
  %91 = vmatpush2.bf16.msra.mxu0 0
  %92 = vmatprep.mubr.bf16.mxu0 0
  %93 = vmatmul.mubr.bf16.gmra.mxu0 %v58
  %v94 = vpop.f32.mrf.mxu0
  %v95 = vadd.f32 0.0, %v94
  %v96 = vpop.f32.mrf.mxu0
  %v97 = vpop.f32.mrf.mxu0
  %v98 = vadd.f32 0.0, %v97
  %v99 = vpop.f32.mrf.mxu0
  %100 = vdwg.mxu0
  %vm101 = vcmask 523264
  %102 = vst.msk [vmem:[#allocation3] sm:$0xff] %vm101, %v95
  %103 = vst.msk [vmem:[#allocation3 + $0x8] sm:$0xff] %vm101, %v98
  %v104 = vld [vmem:[%s3] sm:$0x1]
  %v105 = vld [vmem:[#allocation3] sm:$0x3]
  %v106 = vld [vmem:[#allocation2] sm:$0x3]
  %v108 = vlaneseq
  %v109 = vshrl.u32 %v108, 7
  %v110 = vsub.s32 0, %v109
  %v111 = vrot.slane %v104, %v110
  %v113 = vmul.f32 %v111, %v106
  %v114 = vadd.f32 %v105, %v113
  %vm115 = vcmask 517120
  %116 = vst.msk [vmem:[#allocation3] sm:$0x3] %vm115, %v114
  %v117 = vld [vmem:[#allocation3] sm:$0xff]
  %v118 = vld [vmem:[#allocation3 + $0x8] sm:$0xff]
  %vm121 = vcmask 1041408
  %v122 = vrot.slane %v117, 6
  %v123 = vrot.slane %v118, 6
  %v124 = vsel %vm121, %v122, %v123
  %v127 = vsel %vm121, 0.0, %v122
  %v128 = vmul.f32 %v111, %v127
  %v129 = vmul.f32 %v111, %v124
  %v130 = vadd.f32 %v117, %v128
  %v131 = vadd.f32 %v118, %v129
  %v132 = vmul.f32 %v104, %v104
  %vm135 = vcmask 1043456
  %v136 = vrot.slane %v130, 4
  %v137 = vrot.slane %v131, 4
  %v138 = vsel %vm135, %v136, %v137
  %v141 = vsel %vm135, 0.0, %v136
  %v143 = vlaneseq
  %v144 = vshrl.u32 %v143, 7
  %v145 = vsub.s32 0, %v144
  %v146 = vrot.slane %v132, %v145
  %v148 = vmul.f32 %v146, %v141
  %v149 = vmul.f32 %v146, %v138
  %v150 = vadd.f32 %v130, %v148
  %v151 = vadd.f32 %v131, %v149
  %v152 = vmul.f32 %v132, %v132
  %v154 = vlaneseq
  %v155 = vshrl.u32 %v154, 7
  %v156 = vsub.s32 0, %v155
  %v157 = vrot.slane %v152, %v156
  %v159 = vmul.f32 %v157, 0.0
  %v160 = vmul.f32 %v157, %v150
  %v161 = vadd.f32 %v150, %v159
  %v162 = vadd.f32 %v151, %v160
  %vm163 = vcmask 523270
  %164 = vst.msk [vmem:[#allocation2 - $0x6] sm:$0xc0] %vm163, %v162
  %v165 = vpack.c.bf16 %v162, %v161
  %v166 = vld [vmem:[%s2] sm:$0xf]
  %v167 = vld [vmem:[%s2 + $0x4] sm:$0xf]
  %v168 = vld [vmem:[%s2 + $0x8] sm:$0xf]
  %v169 = vld [vmem:[%s2 + $0xc] sm:$0xf]
  %v170 = vld [vmem:[%s2 + $0x10] sm:$0xf]
  %v171 = vld [vmem:[%s2 + $0x14] sm:$0xf]
  %v172 = vld [vmem:[%s2 + $0x18] sm:$0xf]
  %v173 = vld [vmem:[%s2 + $0x1c] sm:$0xf]
  %v174 = vld [vmem:[%s0] sm:$0xf]
  %v175 = vld [vmem:[%s0 + $0x4] sm:$0xf]
  %v176 = vunpack.c.l.bf16 %v174
  %v177 = vunpack.c.l.bf16 %v175
  %v178 = vld [vmem:[%s4] sm:$0x1]
  %v180 = vlaneseq
  %v181 = vshrl.u32 %v180, 7
  %v182 = vsub.s32 0, %v181
  %v183 = vrot.slane %v178, %v182
  %v185 = vmul.f32 %v183, %v176
  %v186 = vmul.f32 %v183, %v177
  %v195 = vunpack.c.l.b16 %v166
  %v196 = vunpack.c.l.b16 %v167
  %v197 = vunpack.c.l.b16 %v168
  %v198 = vunpack.c.l.b16 %v169
  %v199 = vunpack.c.l.b16 %v170
  %v200 = vunpack.c.l.b16 %v171
  %v201 = vunpack.c.l.b16 %v172
  %v202 = vunpack.c.l.b16 %v173
  %v203 = vpack.c.b16 %v196, %v195
  %v204 = vpack.c.b16 %v198, %v197
  %v205 = vpack.c.b16 %v200, %v199
  %v206 = vpack.c.b16 %v202, %v201
  %v212 = vsel %vm101, %v165, 0
  %214 = vmatprep.subr.bf16.mxu0 0
  %215 = vmatpush1.bf16.msra.mxu0 0
  %216 = vmatprep.subr.bf16.mxu0 0
  %217 = vmatpush1.bf16.msra.mxu0 0
  %218 = vmatprep.subr.bf16.mxu0 0
  %219 = vmatpush1.bf16.msra.mxu0 0
  %220 = vmatprep.subr.bf16.mxu0 0
  %221 = vmatpush1.bf16.msra.mxu0 0
  %222 = vmatprep.subr.bf16.mxu0 0
  %223 = vmatpush1.bf16.msra.mxu0 %v206
  %224 = vmatprep.subr.bf16.mxu0 0
  %225 = vmatpush1.bf16.msra.mxu0 %v205
  %226 = vmatprep.subr.bf16.mxu0 0
  %227 = vmatpush1.bf16.msra.mxu0 %v204
  %228 = vmatprep.subr.bf16.mxu0 0
  %229 = vmatpush1.bf16.msra.mxu0 %v203
  %230 = vmatprep.subr.bf16.mxu0 0
  %231 = vmatpush2.bf16.msra.mxu0 0
  %232 = vmatprep.subr.bf16.mxu0 0
  %233 = vmatpush2.bf16.msra.mxu0 0
  %234 = vmatprep.subr.bf16.mxu0 0
  %235 = vmatpush2.bf16.msra.mxu0 0
  %236 = vmatprep.subr.bf16.mxu0 0
  %237 = vmatpush2.bf16.msra.mxu0 0
  %238 = vmatprep.subr.bf16.mxu0 0
  %239 = vmatpush2.bf16.msra.mxu0 0
  %240 = vmatprep.subr.bf16.mxu0 0
  %241 = vmatpush2.bf16.msra.mxu0 0
  %242 = vmatprep.subr.bf16.mxu0 0
  %243 = vmatpush2.bf16.msra.mxu0 0
  %244 = vmatprep.subr.bf16.mxu0 0
  %245 = vmatpush2.bf16.msra.mxu0 0
  %246 = vmatprep.mubr.bf16.mxu0 0
  %247 = vmatmul.mubr.bf16.gmra.mxu0 %v212
  %v248 = vpop.f32.mrf.mxu0
  %v249 = vadd.f32 %v185, %v248
  %v250 = vpop.f32.mrf.mxu0
  %v251 = vpop.f32.mrf.mxu0
  %v252 = vadd.f32 %v186, %v251
  %v253 = vpop.f32.mrf.mxu0
  %254 = vdwg.mxu0
  %v255 = vsel %vm56, %v249, 0.0
  %256 = vadd.xlane.f32.xlu0 %v255
  %v257 = vpop.xlane.xlu0 %256
  %v258 = vsel %vm56, %v252, 0.0
  %259 = vadd.xlane.f32.xlu0 %v258
  %v260 = vpop.xlane.xlu0 %259
  %v261 = vrcp.pop 32.0
  %v262 = vmul.f32 %v257, %v261
  %v263 = vmul.f32 %v260, %v261
  %v264 = vsub.f32 %v249, %v262
  %v265 = vsub.f32 %v252, %v263
  %v266 = vmul.f32 %v264, %v264
  %v267 = vmul.f32 %v265, %v265
  %v268 = vsel %vm56, %v266, 0.0
  %269 = vadd.xlane.f32.xlu0 %v268
  %v270 = vpop.xlane.xlu0 %269
  %v271 = vsel %vm56, %v267, 0.0
  %272 = vadd.xlane.f32.xlu0 %v271
  %v273 = vpop.xlane.xlu0 %272
  %v274 = vmul.f32 %v270, %v261
  %v275 = vmul.f32 %v273, %v261
  %v276 = vadd.f32 %v274, 1e-05
  %v277 = vadd.f32 %v275, 1e-05
  %v278 = vrsqrt.pop %v276
  %v279 = vrsqrt.pop %v277
  %v280 = vmul.f32 %v264, %v278
  %v281 = vmul.f32 %v265, %v279
  %v282 = vld [vmem:[%s5] sm:$0x1]
  %v284 = vlaneseq
  %v285 = vshrl.u32 %v284, 7
  %v286 = vsub.s32 0, %v285
  %v287 = vrot.slane %v282, %v286
  %v289 = vmul.f32 %v280, %v287
  %v290 = vmul.f32 %v281, %v287
  %v291 = vld [vmem:[%s6] sm:$0x1]
  %v293 = vlaneseq
  %v294 = vshrl.u32 %v293, 7
  %v295 = vsub.s32 0, %v294
  %v296 = vrot.slane %v291, %v295
  %v298 = vadd.f32 %v289, %v296
  %v299 = vadd.f32 %v290, %v296
  %v300 = vpack.c.bf16 %v299, %v298
  %v302 = vunpack.c.l.b16 %v300
  %v303 = vunpack.c.h.b16 %v300
  %v304 = vpack.c.b16 %v302, %v302
  %v305 = vpack.c.b16 %v303, %v303
  %vm308 = vcmask 257024
  %309 = vst.msk [vmem:[%s7] sm:$0xf] %vm308, %v304
  %310 = vst.msk [vmem:[%s7 + $0x4] sm:$0xf] %vm308, %v305
  // Predicated region
  $region34: #{liquid_s4_forward.15} parent=0 // pred_check
    _
  $region35: #{liquid_s4_forward.15} parent=0 // pred_check_branch
    %312 = sbr.rel (0) target = $region37
  $region36: #{liquid_s4_forward.15} parent=0 // pred_region
    _
  $region37: #{liquid_s4_forward.15} parent=0 // pred_fallthru
    _
  // Predicated region
  $region38: #{liquid_s4_forward.15} parent=0 // pred_check
    _
  $region39: #{liquid_s4_forward.15} parent=0 // pred_check_branch
    %314 = sbr.rel (0) target = $region41
  $region40: #{liquid_s4_forward.15} parent=0 // pred_region
    _
  $region41: #{liquid_s4_forward.15} parent=0 // pred_fallthru
    _

// kernel: liquid_s4_forward.27
$region0: #{liquid_s4_forward.27}
  #allocation0 [shape = 'u32[]', space=smem, size = 0x4, offset = 0x4, fixed_abs, tag = 'smem constant byte address 0x4 - core index']
  #allocation1 [shape = 'u32[144,128]{1,0:T(1,128)}', space=vmem, size = 0x12000, scoped, tag = 'internal scratch']
  %s0 = inlined_call_operand.vmem [shape: bf16[16,32], index: 0, kind: input, shape index: {}]
  %s1 = inlined_call_operand.vmem [shape: bf16[32,8], index: 1, kind: input, shape index: {}]
  %s2 = inlined_call_operand.vmem [shape: f32[1,8], index: 2, kind: input, shape index: {}]
  %s3 = inlined_call_operand.vmem [shape: f32[16,8], index: 3, kind: output, shape index: {}]
  %s4 = sld [smem:[#allocation0]]
  $region22: #{liquid_s4_forward.27} parent=0
    _
  %s6 = ssub.s32 1, %s4
  %s7 = scalar_select 0, %s6, %s4
  // Predicated region
  $region2: #{liquid_s4_forward.27} parent=0 // pred_check
    _
  $region3: #{liquid_s4_forward.27} parent=0 // pred_check_branch
    %9 = sbr.rel (0) target = $region5
  $region4: #{liquid_s4_forward.27} parent=0 // pred_region
    _
  $region5: #{liquid_s4_forward.27} parent=0 // pred_fallthru
    _
  // Predicated region
  $region6: #{liquid_s4_forward.27} parent=0 // pred_check
    _
  $region7: #{liquid_s4_forward.27} parent=0 // pred_check_branch
    %11 = sbr.rel (0) target = $region9
  $region8: #{liquid_s4_forward.27} parent=0 // pred_region
    _
  $region9: #{liquid_s4_forward.27} parent=0 // pred_fallthru
    _
  // Predicated region
  $region10: #{liquid_s4_forward.27} parent=0 // pred_check
    _
  $region11: #{liquid_s4_forward.27} parent=0 // pred_check_branch
    %13 = sbr.rel (0) target = $region13
  $region12: #{liquid_s4_forward.27} parent=0 // pred_region
    _
  $region13: #{liquid_s4_forward.27} parent=0 // pred_fallthru
    _
  %v15 = vld [vmem:[%s0] sm:$0xf]
  %v16 = vld [vmem:[%s0 + $0x4] sm:$0xf]
  %v17 = vld [vmem:[%s1] sm:$0xf]
  %v18 = vld [vmem:[%s1 + $0x4] sm:$0xf]
  %v19 = vld [vmem:[%s1 + $0x8] sm:$0xf]
  %v20 = vld [vmem:[%s1 + $0xc] sm:$0xf]
  %v21 = vld [vmem:[%s2] sm:$0x1]
  %v23 = vlaneseq
  %v24 = vshrl.u32 %v23, 7
  %v25 = vsub.s32 0, %v24
  %v26 = vrot.slane %v21, %v25
  %v30 = vunpack.c.l.b16 %v15
  %v31 = vunpack.c.l.b16 %v16
  %v32 = vpack.c.b16 %v31, %v30
  %v37 = vunpack.c.l.b16 %v17
  %v38 = vunpack.c.l.b16 %v18
  %v39 = vunpack.c.l.b16 %v19
  %v40 = vunpack.c.l.b16 %v20
  %v41 = vpack.c.b16 %v38, %v37
  %v42 = vpack.c.b16 %v40, %v39
  %vm45 = vcmask 261120
  %v47 = vsel %vm45, %v32, 0
  %49 = vmatprep.subr.bf16.mxu0 0
  %50 = vmatpush1.bf16.msra.mxu0 0
  %51 = vmatprep.subr.bf16.mxu0 0
  %52 = vmatpush1.bf16.msra.mxu0 0
  %53 = vmatprep.subr.bf16.mxu0 0
  %54 = vmatpush1.bf16.msra.mxu0 0
  %55 = vmatprep.subr.bf16.mxu0 0
  %56 = vmatpush1.bf16.msra.mxu0 0
  %57 = vmatprep.subr.bf16.mxu0 0
  %58 = vmatpush1.bf16.msra.mxu0 0
  %59 = vmatprep.subr.bf16.mxu0 0
  %60 = vmatpush1.bf16.msra.mxu0 0
  %61 = vmatprep.subr.bf16.mxu0 0
  %62 = vmatpush1.bf16.msra.mxu0 %v42
  %63 = vmatprep.subr.bf16.mxu0 0
  %64 = vmatpush1.bf16.msra.mxu0 %v41
  %65 = vmatprep.subr.bf16.mxu0 0
  %66 = vmatpush2.bf16.msra.mxu0 0
  %67 = vmatprep.subr.bf16.mxu0 0
  %68 = vmatpush2.bf16.msra.mxu0 0
  %69 = vmatprep.subr.bf16.mxu0 0
  %70 = vmatpush2.bf16.msra.mxu0 0
  %71 = vmatprep.subr.bf16.mxu0 0
  %72 = vmatpush2.bf16.msra.mxu0 0
  %73 = vmatprep.subr.bf16.mxu0 0
  %74 = vmatpush2.bf16.msra.mxu0 0
  %75 = vmatprep.subr.bf16.mxu0 0
  %76 = vmatpush2.bf16.msra.mxu0 0
  %77 = vmatprep.subr.bf16.mxu0 0
  %78 = vmatpush2.bf16.msra.mxu0 0
  %79 = vmatprep.subr.bf16.mxu0 0
  %80 = vmatpush2.bf16.msra.mxu0 0
  %81 = vmatprep.mubr.bf16.mxu0 0
  %82 = vmatmul.mubr.bf16.gmra.mxu0 %v47
  %v83 = vpop.f32.mrf.mxu0
  %v84 = vadd.f32 %v26, %v83
  %v85 = vpop.f32.mrf.mxu0
  %v86 = vpop.f32.mrf.mxu0
  %v87 = vadd.f32 %v26, %v86
  %v88 = vpop.f32.mrf.mxu0
  %89 = vdwg.mxu0
  %vm90 = vcmask 64512
  %91 = vst.msk [vmem:[%s3] sm:$0xff] %vm90, %v84
  %92 = vst.msk [vmem:[%s3 + $0x8] sm:$0xff] %vm90, %v87
  // Predicated region
  $region14: #{liquid_s4_forward.27} parent=0 // pred_check
    _
  $region15: #{liquid_s4_forward.27} parent=0 // pred_check_branch
    %94 = sbr.rel (0) target = $region17
  $region16: #{liquid_s4_forward.27} parent=0 // pred_region
    _
  $region17: #{liquid_s4_forward.27} parent=0 // pred_fallthru
    _
  // Predicated region
  $region18: #{liquid_s4_forward.27} parent=0 // pred_check
    _
  $region19: #{liquid_s4_forward.27} parent=0 // pred_check_branch
    %96 = sbr.rel (0) target = $region21
  $region20: #{liquid_s4_forward.27} parent=0 // pred_region
    _
  $region21: #{liquid_s4_forward.27} parent=0 // pred_fallthru
    _

// kernel: liquid_s4_forward.18
$region0: #{liquid_s4_forward.18}
  #allocation0 [shape = 'u32[]', space=smem, size = 0x4, offset = 0x4, fixed_abs, tag = 'smem constant byte address 0x4 - core index']
  #allocation1 [shape = 'u32[144,128]{1,0:T(1,128)}', space=vmem, size = 0x12000, scoped, tag = 'internal scratch']
  #allocation2 [shape = 'f32[2,64]{1,0:T(2,128)}', space=vmem, size = 0x400, scoped, tag = 'scratch operand']
  #allocation3 [shape = 'f32[16,64]{1,0:T(8,128)}', space=vmem, size = 0x2000, scoped, tag = 'scratch operand']
  %s0 = inlined_call_operand.vmem [shape: bf16[16,32], index: 0, kind: input, shape index: {}]
  %s1 = inlined_call_operand.vmem [shape: bf16[32,64], index: 1, kind: input, shape index: {}]
  %s2 = inlined_call_operand.vmem [shape: bf16[64,32], index: 2, kind: input, shape index: {}]
  %s3 = inlined_call_operand.vmem [shape: f32[1,64], index: 3, kind: input, shape index: {}]
  %s4 = inlined_call_operand.vmem [shape: f32[1,32], index: 4, kind: input, shape index: {}]
  %s5 = inlined_call_operand.vmem [shape: f32[1,32], index: 5, kind: input, shape index: {}]
  %s6 = inlined_call_operand.vmem [shape: f32[1,32], index: 6, kind: input, shape index: {}]
  %s7 = inlined_call_operand.vmem [shape: bf16[16,32], index: 7, kind: input, shape index: {}]
  %s8 = inlined_call_operand.vmem [shape: f32[1,32], index: 8, kind: input, shape index: {}]
  %s9 = inlined_call_operand.vmem [shape: f32[1,32], index: 9, kind: input, shape index: {}]
  %s10 = inlined_call_operand.vmem [shape: bf16[16,32], index: 10, kind: output, shape index: {}]
  %s11 = sld [smem:[#allocation0]]
  $region54: #{liquid_s4_forward.18} parent=0
    _
  %s13 = ssub.s32 1, %s11
  %s14 = scalar_select 0, %s13, %s11
  // Predicated region
  $region2: #{liquid_s4_forward.18} parent=0 // pred_check
    _
  $region3: #{liquid_s4_forward.18} parent=0 // pred_check_branch
    %16 = sbr.rel (0) target = $region5
  $region4: #{liquid_s4_forward.18} parent=0 // pred_region
    _
  $region5: #{liquid_s4_forward.18} parent=0 // pred_fallthru
    _
  // Predicated region
  $region6: #{liquid_s4_forward.18} parent=0 // pred_check
    _
  $region7: #{liquid_s4_forward.18} parent=0 // pred_check_branch
    %18 = sbr.rel (0) target = $region9
  $region8: #{liquid_s4_forward.18} parent=0 // pred_region
    _
  $region9: #{liquid_s4_forward.18} parent=0 // pred_fallthru
    _
  // Predicated region
  $region10: #{liquid_s4_forward.18} parent=0 // pred_check
    _
  $region11: #{liquid_s4_forward.18} parent=0 // pred_check_branch
    %20 = sbr.rel (0) target = $region13
  $region12: #{liquid_s4_forward.18} parent=0 // pred_region
    _
  $region13: #{liquid_s4_forward.18} parent=0 // pred_fallthru
    _
  // Predicated region
  $region14: #{liquid_s4_forward.18} parent=0 // pred_check
    _
  $region15: #{liquid_s4_forward.18} parent=0 // pred_check_branch
    %22 = sbr.rel (0) target = $region17
  $region16: #{liquid_s4_forward.18} parent=0 // pred_region
    _
  $region17: #{liquid_s4_forward.18} parent=0 // pred_fallthru
    _
  // Predicated region
  $region18: #{liquid_s4_forward.18} parent=0 // pred_check
    _
  $region19: #{liquid_s4_forward.18} parent=0 // pred_check_branch
    %24 = sbr.rel (0) target = $region21
  $region20: #{liquid_s4_forward.18} parent=0 // pred_region
    _
  $region21: #{liquid_s4_forward.18} parent=0 // pred_fallthru
    _
  // Predicated region
  $region22: #{liquid_s4_forward.18} parent=0 // pred_check
    _
  $region23: #{liquid_s4_forward.18} parent=0 // pred_check_branch
    %26 = sbr.rel (0) target = $region25
  $region24: #{liquid_s4_forward.18} parent=0 // pred_region
    _
  $region25: #{liquid_s4_forward.18} parent=0 // pred_fallthru
    _
  // Predicated region
  $region26: #{liquid_s4_forward.18} parent=0 // pred_check
    _
  $region27: #{liquid_s4_forward.18} parent=0 // pred_check_branch
    %28 = sbr.rel (0) target = $region29
  $region28: #{liquid_s4_forward.18} parent=0 // pred_region
    _
  $region29: #{liquid_s4_forward.18} parent=0 // pred_fallthru
    _
  // Predicated region
  $region30: #{liquid_s4_forward.18} parent=0 // pred_check
    _
  $region31: #{liquid_s4_forward.18} parent=0 // pred_check_branch
    %30 = sbr.rel (0) target = $region33
  $region32: #{liquid_s4_forward.18} parent=0 // pred_region
    _
  $region33: #{liquid_s4_forward.18} parent=0 // pred_fallthru
    _
  // Predicated region
  $region34: #{liquid_s4_forward.18} parent=0 // pred_check
    _
  $region35: #{liquid_s4_forward.18} parent=0 // pred_check_branch
    %32 = sbr.rel (0) target = $region37
  $region36: #{liquid_s4_forward.18} parent=0 // pred_region
    _
  $region37: #{liquid_s4_forward.18} parent=0 // pred_fallthru
    _
  // Predicated region
  $region38: #{liquid_s4_forward.18} parent=0 // pred_check
    _
  $region39: #{liquid_s4_forward.18} parent=0 // pred_check_branch
    %34 = sbr.rel (0) target = $region41
  $region40: #{liquid_s4_forward.18} parent=0 // pred_region
    _
  $region41: #{liquid_s4_forward.18} parent=0 // pred_fallthru
    _
  %p36 = scmp.eq.s32.totalorder 0, 0
  // Predicated region
  $region42: #{liquid_s4_forward.18} parent=0 // pred_check
    %p37 = pneg %p36
  $region43: #{liquid_s4_forward.18} parent=0 // pred_check_branch
    %39 = sbr.rel (%p37) target = $region45
  $region44: #{liquid_s4_forward.18} parent=0 // pred_region
    %vm40 = vcmask 517120
    %41 = vst.msk [vmem:[#allocation2] sm:$0x3] %vm40, 0.0
  $region45: #{liquid_s4_forward.18} parent=0 // pred_fallthru
    _
  %v42 = vld [vmem:[%s0] sm:$0xf]
  %v43 = vld [vmem:[%s0 + $0x4] sm:$0xf]
  %v44 = vld [vmem:[%s1] sm:$0xf]
  %v45 = vld [vmem:[%s1 + $0x4] sm:$0xf]
  %v46 = vld [vmem:[%s1 + $0x8] sm:$0xf]
  %v47 = vld [vmem:[%s1 + $0xc] sm:$0xf]
  %v50 = vunpack.c.l.b16 %v42
  %v51 = vunpack.c.l.b16 %v43
  %v52 = vpack.c.b16 %v51, %v50
  %v57 = vunpack.c.l.b16 %v44
  %v58 = vunpack.c.l.b16 %v45
  %v59 = vunpack.c.l.b16 %v46
  %v60 = vunpack.c.l.b16 %v47
  %v61 = vpack.c.b16 %v58, %v57
  %v62 = vpack.c.b16 %v60, %v59
  %vm65 = vcmask 261120
  %v67 = vsel %vm65, %v52, 0
  %69 = vmatprep.subr.bf16.mxu0 0
  %70 = vmatpush1.bf16.msra.mxu0 0
  %71 = vmatprep.subr.bf16.mxu0 0
  %72 = vmatpush1.bf16.msra.mxu0 0
  %73 = vmatprep.subr.bf16.mxu0 0
  %74 = vmatpush1.bf16.msra.mxu0 0
  %75 = vmatprep.subr.bf16.mxu0 0
  %76 = vmatpush1.bf16.msra.mxu0 0
  %77 = vmatprep.subr.bf16.mxu0 0
  %78 = vmatpush1.bf16.msra.mxu0 0
  %79 = vmatprep.subr.bf16.mxu0 0
  %80 = vmatpush1.bf16.msra.mxu0 0
  %81 = vmatprep.subr.bf16.mxu0 0
  %82 = vmatpush1.bf16.msra.mxu0 %v62
  %83 = vmatprep.subr.bf16.mxu0 0
  %84 = vmatpush1.bf16.msra.mxu0 %v61
  %85 = vmatprep.subr.bf16.mxu0 0
  %86 = vmatpush2.bf16.msra.mxu0 0
  %87 = vmatprep.subr.bf16.mxu0 0
  %88 = vmatpush2.bf16.msra.mxu0 0
  %89 = vmatprep.subr.bf16.mxu0 0
  %90 = vmatpush2.bf16.msra.mxu0 0
  %91 = vmatprep.subr.bf16.mxu0 0
  %92 = vmatpush2.bf16.msra.mxu0 0
  %93 = vmatprep.subr.bf16.mxu0 0
  %94 = vmatpush2.bf16.msra.mxu0 0
  %95 = vmatprep.subr.bf16.mxu0 0
  %96 = vmatpush2.bf16.msra.mxu0 0
  %97 = vmatprep.subr.bf16.mxu0 0
  %98 = vmatpush2.bf16.msra.mxu0 0
  %99 = vmatprep.subr.bf16.mxu0 0
  %100 = vmatpush2.bf16.msra.mxu0 0
  %101 = vmatprep.mubr.bf16.mxu0 0
  %102 = vmatmul.mubr.bf16.gmra.mxu0 %v67
  %v103 = vpop.f32.mrf.mxu0
  %v104 = vadd.f32 0.0, %v103
  %v105 = vpop.f32.mrf.mxu0
  %v106 = vpop.f32.mrf.mxu0
  %v107 = vadd.f32 0.0, %v106
  %v108 = vpop.f32.mrf.mxu0
  %109 = vdwg.mxu0
  %vm110 = vcmask 523264
  %111 = vst.msk [vmem:[#allocation3] sm:$0xff] %vm110, %v104
  %112 = vst.msk [vmem:[#allocation3 + $0x8] sm:$0xff] %vm110, %v107
  %v113 = vld [vmem:[%s3] sm:$0x1]
  %v114 = vld [vmem:[#allocation3] sm:$0x3]
  %v115 = vld [vmem:[#allocation2] sm:$0x3]
  %v117 = vlaneseq
  %v118 = vshrl.u32 %v117, 7
  %v119 = vsub.s32 0, %v118
  %v120 = vrot.slane %v113, %v119
  %v122 = vmul.f32 %v120, %v115
  %v123 = vadd.f32 %v114, %v122
  %vm124 = vcmask 517120
  %125 = vst.msk [vmem:[#allocation3] sm:$0x3] %vm124, %v123
  %v126 = vld [vmem:[#allocation3] sm:$0xff]
  %v127 = vld [vmem:[#allocation3 + $0x8] sm:$0xff]
  %vm130 = vcmask 1041408
  %v131 = vrot.slane %v126, 6
  %v132 = vrot.slane %v127, 6
  %v133 = vsel %vm130, %v131, %v132
  %v136 = vsel %vm130, 0.0, %v131
  %v137 = vmul.f32 %v120, %v136
  %v138 = vmul.f32 %v120, %v133
  %v139 = vadd.f32 %v126, %v137
  %v140 = vadd.f32 %v127, %v138
  %v141 = vmul.f32 %v113, %v113
  %vm144 = vcmask 1043456
  %v145 = vrot.slane %v139, 4
  %v146 = vrot.slane %v140, 4
  %v147 = vsel %vm144, %v145, %v146
  %v150 = vsel %vm144, 0.0, %v145
  %v152 = vlaneseq
  %v153 = vshrl.u32 %v152, 7
  %v154 = vsub.s32 0, %v153
  %v155 = vrot.slane %v141, %v154
  %v157 = vmul.f32 %v155, %v150
  %v158 = vmul.f32 %v155, %v147
  %v159 = vadd.f32 %v139, %v157
  %v160 = vadd.f32 %v140, %v158
  %v161 = vmul.f32 %v141, %v141
  %v163 = vlaneseq
  %v164 = vshrl.u32 %v163, 7
  %v165 = vsub.s32 0, %v164
  %v166 = vrot.slane %v161, %v165
  %v168 = vmul.f32 %v166, 0.0
  %v169 = vmul.f32 %v166, %v159
  %v170 = vadd.f32 %v159, %v168
  %v171 = vadd.f32 %v160, %v169
  %vm172 = vcmask 523270
  %173 = vst.msk [vmem:[#allocation2 - $0x6] sm:$0xc0] %vm172, %v171
  %v174 = vpack.c.bf16 %v171, %v170
  %v175 = vld [vmem:[%s2] sm:$0xf]
  %v176 = vld [vmem:[%s2 + $0x4] sm:$0xf]
  %v177 = vld [vmem:[%s2 + $0x8] sm:$0xf]
  %v178 = vld [vmem:[%s2 + $0xc] sm:$0xf]
  %v179 = vld [vmem:[%s2 + $0x10] sm:$0xf]
  %v180 = vld [vmem:[%s2 + $0x14] sm:$0xf]
  %v181 = vld [vmem:[%s2 + $0x18] sm:$0xf]
  %v182 = vld [vmem:[%s2 + $0x1c] sm:$0xf]
  %v183 = vld [vmem:[%s0] sm:$0xf]
  %v184 = vld [vmem:[%s0 + $0x4] sm:$0xf]
  %v185 = vunpack.c.l.bf16 %v183
  %v186 = vunpack.c.l.bf16 %v184
  %v187 = vld [vmem:[%s4] sm:$0x1]
  %v189 = vlaneseq
  %v190 = vshrl.u32 %v189, 7
  %v191 = vsub.s32 0, %v190
  %v192 = vrot.slane %v187, %v191
  %v194 = vmul.f32 %v192, %v185
  %v195 = vmul.f32 %v192, %v186
  %v204 = vunpack.c.l.b16 %v175
  %v205 = vunpack.c.l.b16 %v176
  %v206 = vunpack.c.l.b16 %v177
  %v207 = vunpack.c.l.b16 %v178
  %v208 = vunpack.c.l.b16 %v179
  %v209 = vunpack.c.l.b16 %v180
  %v210 = vunpack.c.l.b16 %v181
  %v211 = vunpack.c.l.b16 %v182
  %v212 = vpack.c.b16 %v205, %v204
  %v213 = vpack.c.b16 %v207, %v206
  %v214 = vpack.c.b16 %v209, %v208
  %v215 = vpack.c.b16 %v211, %v210
  %v221 = vsel %vm110, %v174, 0
  %223 = vmatprep.subr.bf16.mxu0 0
  %224 = vmatpush1.bf16.msra.mxu0 0
  %225 = vmatprep.subr.bf16.mxu0 0
  %226 = vmatpush1.bf16.msra.mxu0 0
  %227 = vmatprep.subr.bf16.mxu0 0
  %228 = vmatpush1.bf16.msra.mxu0 0
  %229 = vmatprep.subr.bf16.mxu0 0
  %230 = vmatpush1.bf16.msra.mxu0 0
  %231 = vmatprep.subr.bf16.mxu0 0
  %232 = vmatpush1.bf16.msra.mxu0 %v215
  %233 = vmatprep.subr.bf16.mxu0 0
  %234 = vmatpush1.bf16.msra.mxu0 %v214
  %235 = vmatprep.subr.bf16.mxu0 0
  %236 = vmatpush1.bf16.msra.mxu0 %v213
  %237 = vmatprep.subr.bf16.mxu0 0
  %238 = vmatpush1.bf16.msra.mxu0 %v212
  %239 = vmatprep.subr.bf16.mxu0 0
  %240 = vmatpush2.bf16.msra.mxu0 0
  %241 = vmatprep.subr.bf16.mxu0 0
  %242 = vmatpush2.bf16.msra.mxu0 0
  %243 = vmatprep.subr.bf16.mxu0 0
  %244 = vmatpush2.bf16.msra.mxu0 0
  %245 = vmatprep.subr.bf16.mxu0 0
  %246 = vmatpush2.bf16.msra.mxu0 0
  %247 = vmatprep.subr.bf16.mxu0 0
  %248 = vmatpush2.bf16.msra.mxu0 0
  %249 = vmatprep.subr.bf16.mxu0 0
  %250 = vmatpush2.bf16.msra.mxu0 0
  %251 = vmatprep.subr.bf16.mxu0 0
  %252 = vmatpush2.bf16.msra.mxu0 0
  %253 = vmatprep.subr.bf16.mxu0 0
  %254 = vmatpush2.bf16.msra.mxu0 0
  %255 = vmatprep.mubr.bf16.mxu0 0
  %256 = vmatmul.mubr.bf16.gmra.mxu0 %v221
  %v257 = vpop.f32.mrf.mxu0
  %v258 = vadd.f32 %v194, %v257
  %v259 = vpop.f32.mrf.mxu0
  %v260 = vpop.f32.mrf.mxu0
  %v261 = vadd.f32 %v195, %v260
  %v262 = vpop.f32.mrf.mxu0
  %263 = vdwg.mxu0
  %v264 = vsel %vm65, %v258, 0.0
  %265 = vadd.xlane.f32.xlu0 %v264
  %v266 = vpop.xlane.xlu0 %265
  %v267 = vsel %vm65, %v261, 0.0
  %268 = vadd.xlane.f32.xlu0 %v267
  %v269 = vpop.xlane.xlu0 %268
  %v270 = vrcp.pop 32.0
  %v271 = vmul.f32 %v266, %v270
  %v272 = vmul.f32 %v269, %v270
  %v273 = vsub.f32 %v258, %v271
  %v274 = vsub.f32 %v261, %v272
  %v275 = vmul.f32 %v273, %v273
  %v276 = vmul.f32 %v274, %v274
  %v277 = vsel %vm65, %v275, 0.0
  %278 = vadd.xlane.f32.xlu0 %v277
  %v279 = vpop.xlane.xlu0 %278
  %v280 = vsel %vm65, %v276, 0.0
  %281 = vadd.xlane.f32.xlu0 %v280
  %v282 = vpop.xlane.xlu0 %281
  %v283 = vmul.f32 %v279, %v270
  %v284 = vmul.f32 %v282, %v270
  %v285 = vadd.f32 %v283, 1e-05
  %v286 = vadd.f32 %v284, 1e-05
  %v287 = vrsqrt.pop %v285
  %v288 = vrsqrt.pop %v286
  %v289 = vmul.f32 %v273, %v287
  %v290 = vmul.f32 %v274, %v288
  %v291 = vld [vmem:[%s5] sm:$0x1]
  %v293 = vlaneseq
  %v294 = vshrl.u32 %v293, 7
  %v295 = vsub.s32 0, %v294
  %v296 = vrot.slane %v291, %v295
  %v298 = vmul.f32 %v289, %v296
  %v299 = vmul.f32 %v290, %v296
  %v300 = vld [vmem:[%s6] sm:$0x1]
  %v302 = vlaneseq
  %v303 = vshrl.u32 %v302, 7
  %v304 = vsub.s32 0, %v303
  %v305 = vrot.slane %v300, %v304
  %v307 = vadd.f32 %v298, %v305
  %v308 = vadd.f32 %v299, %v305
  %v309 = vld [vmem:[%s7] sm:$0xf]
  %v310 = vld [vmem:[%s7 + $0x4] sm:$0xf]
  %v311 = vunpack.c.l.bf16 %v309
  %v312 = vunpack.c.l.bf16 %v310
  %v313 = vadd.f32 %v307, %v311
  %v314 = vadd.f32 %v308, %v312
  %v315 = vsel %vm65, %v313, 0.0
  %316 = vadd.xlane.f32.xlu0 %v315
  %v317 = vpop.xlane.xlu0 %316
  %v318 = vsel %vm65, %v314, 0.0
  %319 = vadd.xlane.f32.xlu0 %v318
  %v320 = vpop.xlane.xlu0 %319
  %v321 = vmul.f32 %v317, %v270
  %v322 = vmul.f32 %v320, %v270
  %v323 = vsub.f32 %v313, %v321
  %v324 = vsub.f32 %v314, %v322
  %v325 = vmul.f32 %v323, %v323
  %v326 = vmul.f32 %v324, %v324
  %v327 = vsel %vm65, %v325, 0.0
  %328 = vadd.xlane.f32.xlu0 %v327
  %v329 = vpop.xlane.xlu0 %328
  %v330 = vsel %vm65, %v326, 0.0
  %331 = vadd.xlane.f32.xlu0 %v330
  %v332 = vpop.xlane.xlu0 %331
  %v333 = vmul.f32 %v329, %v270
  %v334 = vmul.f32 %v332, %v270
  %v335 = vadd.f32 %v333, 1e-05
  %v336 = vadd.f32 %v334, 1e-05
  %v337 = vrsqrt.pop %v335
  %v338 = vrsqrt.pop %v336
  %v339 = vmul.f32 %v323, %v337
  %v340 = vmul.f32 %v324, %v338
  %v341 = vld [vmem:[%s8] sm:$0x1]
  %v343 = vlaneseq
  %v344 = vshrl.u32 %v343, 7
  %v345 = vsub.s32 0, %v344
  %v346 = vrot.slane %v341, %v345
  %v348 = vmul.f32 %v339, %v346
  %v349 = vmul.f32 %v340, %v346
  %v350 = vld [vmem:[%s9] sm:$0x1]
  %v352 = vlaneseq
  %v353 = vshrl.u32 %v352, 7
  %v354 = vsub.s32 0, %v353
  %v355 = vrot.slane %v350, %v354
  %v357 = vadd.f32 %v348, %v355
  %v358 = vadd.f32 %v349, %v355
  %v359 = vpack.c.bf16 %v358, %v357
  %v361 = vunpack.c.l.b16 %v359
  %v362 = vunpack.c.h.b16 %v359
  %v363 = vpack.c.b16 %v361, %v361
  %v364 = vpack.c.b16 %v362, %v362
  %vm367 = vcmask 257024
  %368 = vst.msk [vmem:[%s10] sm:$0xf] %vm367, %v363
  %369 = vst.msk [vmem:[%s10 + $0x4] sm:$0xf] %vm367, %v364
  // Predicated region
  $region46: #{liquid_s4_forward.18} parent=0 // pred_check
    _
  $region47: #{liquid_s4_forward.18} parent=0 // pred_check_branch
    %371 = sbr.rel (0) target = $region49
  $region48: #{liquid_s4_forward.18} parent=0 // pred_region
    _
  $region49: #{liquid_s4_forward.18} parent=0 // pred_fallthru
    _
  // Predicated region
  $region50: #{liquid_s4_forward.18} parent=0 // pred_check
    _
  $region51: #{liquid_s4_forward.18} parent=0 // pred_check_branch
    %373 = sbr.rel (0) target = $region53
  $region52: #{liquid_s4_forward.18} parent=0 // pred_region
    _
  $region53: #{liquid_s4_forward.18} parent=0 // pred_fallthru
    _

</llo_original>
